<compile_context>
chip_gen: v7x
topology: tpu7x:2x2x1
jax: 0.10.0
libtpu: 0.0.40
codegen_flags: <defaults>
</compile_context>

<pallas_src>
import functools

import jax
import jax.numpy as jnp
from jax.experimental import pallas as pl
from jax.experimental.pallas import tpu as pltpu

ARCH = [(7, 64, 2, 3), 'M', (3, 192, 1, 1), 'M', (1, 128, 1, 0), (3, 256, 1, 1),
        (1, 256, 1, 0), (3, 512, 1, 1), 'M', [(1, 256, 1, 0), (3, 512, 1, 1), 4],
        (1, 512, 1, 0), (3, 1024, 1, 1), 'M', [(1, 512, 1, 0), (3, 1024, 1, 1), 2],
        (3, 1024, 1, 1), (3, 1024, 2, 1), (3, 1024, 1, 1), (3, 1024, 1, 1)]

# 48 MB scoped VMEM: above the 32 MB default (deeper buffering on v5e/v6e),
# still under the 64 MiB/TensorCore physical budget of v7x.
_VMEM_LIMIT = 48 * 1024 * 1024
_ALPHA = 0.1


def _round_up(x, m):
    return (x + m - 1) // m * m


# ---------------------------------------------------------------------------
# General Conv + folded (eval-mode) BatchNorm + LeakyReLU(0.1), optionally
# fused with the MaxPool2d(2,2) that follows it in the architecture.
#
# The wrapper zero-pads the NHWC input, space-to-depths it for stride s into
# phase slabs (s, s, L, Cin) flattened with row pitch Wpse (multiple of 8).
# Inside the kernel, the contribution of kernel offset (di, dj) is a
# contiguous row slice of the flattened slab matmul'd with the (Cin, tn)
# weight slice and accumulated in an f32 VMEM scratch.  The epilogue applies
# scale/bias + LeakyReLU over the whole accumulator in one pass and either
# stores the padded-width slab densely (no pool) or reduces 2x2 windows
# (row-pair max on a free 4-D view, column-pair max via sublane-strided VMEM
# reads) and stores the pooled tile.
# ---------------------------------------------------------------------------
def _conv_kernel(k, s, OH, OW, Wpse, alpha, pool,
                 x_ref, w_ref, scale_ref, bias_ref, o_ref, acc_ref, *extra):
    M = OH * Wpse
    first = True
    for di in range(k):
        for dj in range(k):
            start = (di // s) * Wpse + (dj // s)
            lhs = x_ref[0, di % s, dj % s, pl.ds(start, M), :]        # (M, Cin) bf16
            contrib = jnp.dot(lhs, w_ref[di * k + dj],
                              preferred_element_type=jnp.float32)     # (M, tn) f32
            if first:
                acc_ref[...] = contrib
                first = False
            else:
                acc_ref[...] += contrib
    tn = acc_ref.shape[-1]
    y = acc_ref[...] * scale_ref[...] + bias_ref[...]                 # f32 epilogue
    y = jnp.maximum(y, alpha * y)
    if not pool:
        # one dense, lane/sublane-aligned store of the padded-width slab
        o_ref[0] = y.reshape(OH, Wpse, tn).astype(o_ref.dtype)
    else:
        rm_ref, = extra
        y4 = y.reshape(OH // 2, 2, Wpse, tn)                          # free view
        rm_ref[...] = jnp.maximum(y4[:, 0], y4[:, 1])                 # row-pair max
        cm = jnp.maximum(rm_ref[:, pl.ds(0, OW // 2, 2), :],          # col-pair max
                         rm_ref[:, pl.ds(1, OW // 2, 2), :])
        o_ref[0] = cm.astype(o_ref.dtype)


@functools.lru_cache(maxsize=None)
def _build_conv_call(N, Cin, Cout, k, s, OH, OW, Wpse, L, tn, pool,
                     weights_outer):
    kernel = functools.partial(_conv_kernel, k, s, OH, OW, Wpse, _ALPHA, pool)
    if pool:
        out_shape = jax.ShapeDtypeStruct((N, OH // 2, OW // 2, Cout), jnp.bfloat16)
        out_block = (1, OH // 2, OW // 2, tn)
    else:
        out_shape = jax.ShapeDtypeStruct((N, OH, Wpse, Cout), jnp.bfloat16)
        out_block = (1, OH, Wpse, tn)
    scratch = [pltpu.VMEM((OH * Wpse, tn), jnp.float32)]
    if pool:
        scratch.append(pltpu.VMEM((OH // 2, Wpse, tn), jnp.float32))

    if weights_outer:
        # big weights: keep the Cout-tile index on the outer axis so each
        # weight block is DMA'd from HBM once (not once per sample)
        grid = (Cout // tn, N)
        x_map = lambda j, n: (n, 0, 0, 0, 0)
        w_map = lambda j, n: (0, 0, j)
        v_map = lambda j, n: (0, j)
        o_map = lambda j, n: (n, 0, 0, j)
    else:
        # big activations: keep the sample index on the outer axis so the
        # activation slab is DMA'd once per sample
        grid = (N, Cout // tn)
        x_map = lambda n, j: (n, 0, 0, 0, 0)
        w_map = lambda n, j: (0, 0, j)
        v_map = lambda n, j: (0, j)
        o_map = lambda n, j: (n, 0, 0, j)

    return pl.pallas_call(
        kernel,
        out_shape=out_shape,
        grid=grid,
        in_specs=[
            pl.BlockSpec((1, s, s, L, Cin), x_map),
            pl.BlockSpec((k * k, Cin, tn), w_map),
            pl.BlockSpec((1, tn), v_map),
            pl.BlockSpec((1, tn), v_map),
        ],
        out_specs=pl.BlockSpec(out_block, o_map),
        scratch_shapes=scratch,
        compiler_params=pltpu.CompilerParams(
            dimension_semantics=("parallel", "parallel"),
            vmem_limit_bytes=_VMEM_LIMIT),
    )


def conv_block(x, prm, valid_w):
    k, s, p, pool = prm['k'], prm['s'], prm['p'], prm['pool']
    N, H, _, Cin = x.shape
    W = valid_w
    x = x[:, :, :W, :]                       # fuses into the pad copy below
    Cout = prm['w'].shape[-1]
    OH = (H + 2 * p - k) // s + 1
    OW = (W + 2 * p - k) // s + 1
    if pool:
        assert OH % 2 == 0 and OW % 2 == 0, (OH, OW)
    ks = (k - 1) // s
    Hps, Wps = OH + ks, OW + ks
    Wpse = _round_up(Wps, 8)                 # row pitch: layout-free reshapes
    TH, TW = s * (Hps + 1), s * Wpse
    pb = max(TH - H - p, 0)
    pr = max(TW - W - p, 0)
    xp = jnp.pad(x, ((0, 0), (p, pb), (p, pr), (0, 0)))[:, :TH, :TW, :]
    L = (Hps + 1) * Wpse
    xph = xp.reshape(N, Hps + 1, s, Wpse, s, Cin)
    xph = xph.transpose(0, 2, 4, 1, 3, 5).reshape(N, s, s, L, Cin)
    tn = Cout if Cout <= 256 else 256
    w_bytes = k * k * Cin * Cout * 2
    a_bytes = s * s * L * Cin * 2
    weights_outer = w_bytes > a_bytes
    call = _build_conv_call(N, Cin, Cout, k, s, OH, OW, Wpse, L, tn,
                            pool, weights_outer)
    out = call(xph, prm['w'], prm['scale'], prm['bias'])
    return out, (OW // 2 if pool else OW)


# ---------------------------------------------------------------------------
# First conv (7x7, s=2, Cin=3) + BN + LeakyReLU + fused MaxPool2d(2,2).
# The wrapper builds an im2col activation (K = k*k*Cin padded to 256) so the
# MXU contraction is dense; the kernel is a single matmul per (sample,
# row-tile) block with the pooled epilogue.
# ---------------------------------------------------------------------------
def _conv1_kernel(rh, OW, alpha, x_ref, w_ref, scale_ref, bias_ref, o_ref,
                  rm_ref):
    kp = x_ref.shape[-1]
    cout = w_ref.shape[-1]
    lhs = x_ref[0].reshape(rh * OW, kp)                               # bf16
    y = jnp.dot(lhs, w_ref[...], preferred_element_type=jnp.float32)
    y = y * scale_ref[...] + bias_ref[...]
    y = jnp.maximum(y, alpha * y)
    y4 = y.reshape(rh // 2, 2, OW, cout)
    rm_ref[...] = jnp.maximum(y4[:, 0], y4[:, 1])                     # row-pair max
    cm = jnp.maximum(rm_ref[:, pl.ds(0, OW // 2, 2), :],              # col-pair max
                     rm_ref[:, pl.ds(1, OW // 2, 2), :])
    o_ref[0] = cm.astype(o_ref.dtype)


@functools.lru_cache(maxsize=None)
def _build_conv1_call(N, OH, OW, Kp, Cout, rh):
    kernel = functools.partial(_conv1_kernel, rh, OW, _ALPHA)
    return pl.pallas_call(
        kernel,
        out_shape=jax.ShapeDtypeStruct((N, OH // 2, OW // 2, Cout), jnp.bfloat16),
        grid=(N, OH // rh),
        in_specs=[
            pl.BlockSpec((1, rh, OW, Kp), lambda n, i: (n, i, 0, 0)),
            pl.BlockSpec((Kp, Cout), lambda n, i: (0, 0)),
            pl.BlockSpec((1, Cout), lambda n, i: (0, 0)),
            pl.BlockSpec((1, Cout), lambda n, i: (0, 0)),
        ],
        out_specs=pl.BlockSpec((1, rh // 2, OW // 2, Cout),
                               lambda n, i: (n, i, 0, 0)),
        scratch_shapes=[pltpu.VMEM((rh // 2, OW, Cout), jnp.float32)],
        compiler_params=pltpu.CompilerParams(
            dimension_semantics=("parallel", "parallel"),
            vmem_limit_bytes=_VMEM_LIMIT),
    )


def conv1_pool_block(x, prm, valid_w):
    k, s, p = prm['k'], prm['s'], prm['p']
    N, H, _, Cin = x.shape
    W = valid_w
    x = x[:, :, :W, :]
    OH = (H + 2 * p - k) // s + 1
    OW = (W + 2 * p - k) // s + 1
    assert OH % 2 == 0 and OW % 2 == 0, (OH, OW)
    xp = jnp.pad(x, ((0, 0), (p, p), (p, p), (0, 0)))
    # im2col: ordering (di, dj, cin) matches the weight reshape in init.
    patches = [xp[:, di:di + s * OH:s, dj:dj + s * OW:s, :]
               for di in range(k) for dj in range(k)]
    pat = jnp.concatenate(patches, axis=-1)                # (N, OH, OW, k*k*Cin)
    Kp = prm['wmat'].shape[0]
    pat = jnp.pad(pat, ((0, 0), (0, 0), (0, 0), (0, Kp - k * k * Cin)))
    Cout = prm['wmat'].shape[-1]
    cap = max(2, 4096 // OW)
    rh = 2
    for d in range(2, OH + 1, 2):
        if OH % d == 0 and d <= cap:
            rh = d
    call = _build_conv1_call(N, OH, OW, Kp, Cout, rh)
    out = call(pat, prm['wmat'], prm['scale'], prm['bias'])
    return out, OW // 2


# ---------------------------------------------------------------------------
# Fused Linear kernel: out = leaky_relu(A @ W + b, alpha); bf16 weights
# streamed over a K grid axis into an f32 accumulator; output tiled over a
# parallel N axis (alpha=1.0 -> no activation).
# ---------------------------------------------------------------------------
def _linear_kernel(alpha, a_ref, w_ref, b_ref, o_ref, acc_ref):
    kk = pl.program_id(1)

    @pl.when(kk == 0)
    def _():
        acc_ref[...] = jnp.zeros_like(acc_ref)

    acc_ref[...] += jnp.dot(a_ref[...], w_ref[...],
                            preferred_element_type=jnp.float32)

    @pl.when(kk == pl.num_programs(1) - 1)
    def _():
        y = acc_ref[...] + b_ref[...]
        o_ref[...] = jnp.maximum(y, alpha * y).astype(o_ref.dtype)


@functools.lru_cache(maxsize=None)
def _build_linear_call(Mp, Kp, Np, tk, tn, alpha, out_dtype_name):
    out_dtype = jnp.dtype(out_dtype_name)
    return pl.pallas_call(
        functools.partial(_linear_kernel, alpha),
        out_shape=jax.ShapeDtypeStruct((Mp, Np), out_dtype),
        grid=(Np // tn, Kp // tk),
        in_specs=[
            pl.BlockSpec((Mp, tk), lambda j, kk: (0, kk)),
            pl.BlockSpec((tk, tn), lambda j, kk: (kk, j)),
            pl.BlockSpec((1, tn), lambda j, kk: (0, j)),
        ],
        out_specs=pl.BlockSpec((Mp, tn), lambda j, kk: (0, j)),
        scratch_shapes=[pltpu.VMEM((Mp, tn), jnp.float32)],
        compiler_params=pltpu.CompilerParams(
            dimension_semantics=("parallel", "arbitrary"),
            vmem_limit_bytes=_VMEM_LIMIT),
    )


def fused_linear(a, w, b, alpha, out_dtype):
    Mp, Kp = a.shape
    Np = w.shape[1]
    tk = Kp
    for cand in (7168, 4096, 3584, 2048, 1024, 512):
        if Kp % cand == 0:
            tk = cand
            break
    tn = 256 if (Np % 256 == 0 and Np > 256) else Np
    call = _build_linear_call(Mp, Kp, Np, tk, tn, float(alpha),
                              jnp.dtype(out_dtype).name)
    return call(a, w, b)


# ---------------------------------------------------------------------------
# Parameter init (all weight preprocessing hoisted here) and full forward.
# ---------------------------------------------------------------------------
def init_params(key, in_channels, S, B, C):
    entries = []
    cin = in_channels
    for item in ARCH:
        if isinstance(item, tuple):
            entries.append(('conv', item[0], item[1], item[2], item[3], cin))
            cin = item[1]
        elif isinstance(item, str):
            entries.append(('pool',))
        else:
            c1, c2, reps = item
            for _ in range(reps):
                entries.append(('conv', c1[0], c1[1], c1[2], c1[3], cin))
                entries.append(('conv', c2[0], c2[1], c2[2], c2[3], c1[1]))
                cin = c2[1]

    # fuse every MaxPool2d(2,2) into the preceding conv's epilogue
    fused = []
    i = 0
    while i < len(entries):
        e = entries[i]
        if e[0] != 'conv':
            raise ValueError('MaxPool without a preceding conv is unsupported')
        pool = (i + 1 < len(entries) and entries[i + 1][0] == 'pool')
        fused.append((e[1], e[2], e[3], e[4], e[5], pool))
        i += 2 if pool else 1

    layers = []
    for idx, (k, cout, s, p, cin, pool) in enumerate(fused):
        key, sub = jax.random.split(key)
        std = (2.0 / (k * k * cin)) ** 0.5
        w = jax.random.normal(sub, (k, k, cin, cout), jnp.float32) * std
        gamma = jnp.ones((cout,), jnp.float32)
        beta = jnp.zeros((cout,), jnp.float32)
        mean = jnp.zeros((cout,), jnp.float32)
        var = jnp.ones((cout,), jnp.float32)
        scale = gamma / jnp.sqrt(var + 1e-5)           # eval-mode BN fold
        bias = beta - mean * scale
        prm = dict(k=k, s=s, p=p, pool=pool,
                   scale=scale.reshape(1, cout), bias=bias.reshape(1, cout))
        if idx == 0 and pool and k * k * cin <= 512:
            Kp = _round_up(k * k * cin, 256)
            wmat = w.reshape(k * k * cin, cout)        # (di, dj, cin) ordering
            wmat = jnp.pad(wmat, ((0, Kp - k * k * cin), (0, 0)))
            prm['wmat'] = wmat.astype(jnp.bfloat16)
            layers.append(('im2col', prm))
        else:
            prm['w'] = w.reshape(k * k, cin, cout).astype(jnp.bfloat16)
            layers.append(('conv', prm))

    d_in, d_hidden, d_out = 1024 * S * S, 496, S * S * (C + B * 5)
    Kp1 = _round_up(d_in, 512)
    Nh = _round_up(d_hidden, 512)     # fc1 out width == fc2 K width -> chain directly
    Np2 = _round_up(d_out, 128)
    key, k1, k2, k3, k4 = jax.random.split(key, 5)
    w1 = jax.random.normal(k1, (d_in, d_hidden), jnp.float32) * (1.0 / d_in) ** 0.5
    b1 = jax.random.normal(k2, (d_hidden,), jnp.float32) * 0.01
    w2 = jax.random.normal(k3, (d_hidden, d_out), jnp.float32) * (1.0 / d_hidden) ** 0.5
    b2 = jax.random.normal(k4, (d_out,), jnp.float32) * 0.01
    fc = dict(
        w1=jnp.pad(w1, ((0, Kp1 - d_in), (0, Nh - d_hidden))).astype(jnp.bfloat16),
        b1=jnp.pad(b1, (0, Nh - d_hidden)).reshape(1, Nh),
        w2=jnp.pad(w2, ((0, Nh - d_hidden), (0, Np2 - d_out))).astype(jnp.bfloat16),
        b2=jnp.pad(b2, (0, Np2 - d_out)).reshape(1, Np2),
        d_in=d_in, d_out=d_out)
    return layers, fc


def yolov1_forward(x_nchw, layers, fc):
    x = jnp.transpose(x_nchw, (0, 2, 3, 1)).astype(jnp.bfloat16)   # NCHW -> NHWC, bf16
    valid_w = x.shape[2]
    for kind, prm in layers:
        if kind == 'im2col':
            x, valid_w = conv1_pool_block(x, prm, valid_w)
        else:
            x, valid_w = conv_block(x, prm, valid_w)
    n = x.shape[0]
    x = x[:, :, :valid_w, :]
    # match torch.flatten(x, start_dim=1) on NCHW activations
    flat = jnp.transpose(x, (0, 3, 1, 2)).reshape(n, -1)
    Mp = _round_up(n, 8)
    Kp1 = fc['w1'].shape[0]
    flat = jnp.pad(flat, ((0, Mp - n), (0, Kp1 - flat.shape[1])))
    h = fused_linear(flat, fc['w1'], fc['b1'], alpha=0.1,
                     out_dtype=jnp.bfloat16)           # Linear + Dropout(0.0) + LeakyReLU
    out = fused_linear(h, fc['w2'], fc['b2'], alpha=1.0,
                       out_dtype=jnp.float32)          # final Linear
    return out[:n, :fc['d_out']]


if __name__ == "__main__":
    key = jax.random.PRNGKey(0)
    S, B, C = 1, 2, 3            # split_size, num_boxes, num_classes (kept small)
    BATCH, IN_CH, HW = 2, 3, 64  # 64x64 input -> darknet output (BATCH, 1024, 1, 1)
    kx, kp = jax.random.split(key)
    x = jax.random.normal(kx, (BATCH, IN_CH, HW, HW), jnp.float32)
    layers, fc = init_params(kp, IN_CH, S, B, C)

    out = yolov1_forward(x, layers, fc)
    out = jax.block_until_ready(out)
    assert out.shape == (BATCH, S * S * (C + B * 5)), out.shape
    assert bool(jnp.all(jnp.isfinite(out)))
    print("KERNEL_OK")
</pallas_src>

<mosaic_0001>
module attributes {stable_mosaic.version = 11 : i64} {
  func.func @_conv1_kernel(%arg0: i32, %arg1: i32, %arg2: memref<1x32x32x256xbf16, #tpu.memory_space<vmem>>, %arg3: memref<256x64xbf16, #tpu.memory_space<vmem>>, %arg4: memref<1x64xf32, #tpu.memory_space<vmem>>, %arg5: memref<1x64xf32, #tpu.memory_space<vmem>>, %arg6: memref<1x16x16x64xbf16, #tpu.memory_space<vmem>>, %arg7: memref<16x32x64xf32, #tpu.memory_space<vmem>>) attributes {dimension_semantics = [#tpu.dimension_semantics<parallel>, #tpu.dimension_semantics<parallel>], iteration_bounds = array<i64: 2, 1>, scalar_prefetch = 0 : i64, scratch_operands = 1 : i64, tpu.core_type = #tpu.core_type<tc>, window_params = [{transform_indices = @transform_0, window_bounds = array<i64: 1, 32, 32, 256>}, {pipeline_mode = #tpu.pipeline_mode<synchronous>, transform_indices = @transform_1, window_bounds = array<i64: 256, 64>}, {pipeline_mode = #tpu.pipeline_mode<synchronous>, transform_indices = @transform_2, window_bounds = array<i64: 1, 64>}, {pipeline_mode = #tpu.pipeline_mode<synchronous>, transform_indices = @transform_3, window_bounds = array<i64: 1, 64>}, {transform_indices = @transform_4, window_bounds = array<i64: 1, 16, 16, 64>}]} {
    %c0 = arith.constant 0 : index
    %c0_0 = arith.constant 0 : index
    %c0_1 = arith.constant 0 : index
    %c0_2 = arith.constant 0 : index
    %0 = vector.load %arg2[%c0, %c0_0, %c0_1, %c0_2] : memref<1x32x32x256xbf16, #tpu.memory_space<vmem>>, vector<1x32x32x256xbf16>
    %1 = vector.shape_cast %0 : vector<1x32x32x256xbf16> to vector<32x32x256xbf16>
    %2 = vector.shape_cast %1 : vector<32x32x256xbf16> to vector<1024x256xbf16>
    %c0_3 = arith.constant 0 : index
    %c0_4 = arith.constant 0 : index
    %3 = vector.load %arg3[%c0_3, %c0_4] : memref<256x64xbf16, #tpu.memory_space<vmem>>, vector<256x64xbf16>
    %cst = arith.constant dense<0.000000e+00> : vector<1024x64xf32>
    %4 = tpu.matmul %2, %3, %cst {dimension_numbers = #tpu.dot_dimension_numbers<[1], [0], [0], [1], [0, 0, 1, 1], [], []>} : vector<1024x256xbf16>, vector<256x64xbf16>, vector<1024x64xf32> -> vector<1024x64xf32>
    %c0_5 = arith.constant 0 : index
    %c0_6 = arith.constant 0 : index
    %5 = vector.load %arg4[%c0_5, %c0_6] : memref<1x64xf32, #tpu.memory_space<vmem>>, vector<1x64xf32>
    %6 = vector.broadcast %5 : vector<1x64xf32> to vector<1024x64xf32>
    %7 = arith.mulf %4, %6 : vector<1024x64xf32>
    %c0_7 = arith.constant 0 : index
    %c0_8 = arith.constant 0 : index
    %8 = vector.load %arg5[%c0_7, %c0_8] : memref<1x64xf32, #tpu.memory_space<vmem>>, vector<1x64xf32>
    %9 = vector.broadcast %8 : vector<1x64xf32> to vector<1024x64xf32>
    %10 = arith.addf %7, %9 : vector<1024x64xf32>
    %cst_9 = arith.constant 1.000000e-01 : f32
    %11 = vector.broadcast %cst_9 : f32 to vector<1024x64xf32>
    %12 = arith.mulf %11, %10 : vector<1024x64xf32>
    %13 = arith.maximumf %10, %12 : vector<1024x64xf32>
    %14 = vector.shape_cast %13 : vector<1024x64xf32> to vector<16x2x32x64xf32>
    %15 = vector.extract_strided_slice %14 {offsets = [0, 0, 0, 0], sizes = [16, 1, 32, 64], strides = [1, 1, 1, 1]} : vector<16x2x32x64xf32> to vector<16x1x32x64xf32>
    %16 = vector.shape_cast %15 : vector<16x1x32x64xf32> to vector<16x32x64xf32>
    %17 = vector.extract_strided_slice %14 {offsets = [0, 1, 0, 0], sizes = [16, 1, 32, 64], strides = [1, 1, 1, 1]} : vector<16x2x32x64xf32> to vector<16x1x32x64xf32>
    %18 = vector.shape_cast %17 : vector<16x1x32x64xf32> to vector<16x32x64xf32>
    %19 = arith.maximumf %16, %18 : vector<16x32x64xf32>
    %c0_10 = arith.constant 0 : index
    %c0_11 = arith.constant 0 : index
    %c0_12 = arith.constant 0 : index
    %20 = vector.load %arg7[%c0_10, %c0_11, %c0_12] : memref<16x32x64xf32, #tpu.memory_space<vmem>>, vector<16x32x64xf32>
    tpu.vector_store %arg7[%c0_10, %c0_11, %c0_12], %19 {strides = array<i32>} : memref<16x32x64xf32, #tpu.memory_space<vmem>>, vector<16x32x64xf32>,
    %c0_13 = arith.constant 0 : index
    %c0_14 = arith.constant 0 : index
    %c0_15 = arith.constant 0 : index
    %21 = tpu.strided_load %arg7[%c0_13, %c0_14, %c0_15] {strides = array<i32: 1, 2, 1>} : memref<16x32x64xf32, #tpu.memory_space<vmem>>, vector<16x16x64xf32>
    %c0_16 = arith.constant 0 : index
    %c1 = arith.constant 1 : index
    %c0_17 = arith.constant 0 : index
    %22 = tpu.strided_load %arg7[%c0_16, %c1, %c0_17] {strides = array<i32: 1, 2, 1>} : memref<16x32x64xf32, #tpu.memory_space<vmem>>, vector<16x16x64xf32>
    %23 = arith.maximumf %21, %22 : vector<16x16x64xf32>
    %24 = arith.truncf %23 : vector<16x16x64xf32> to vector<16x16x64xbf16>
    %c0_18 = arith.constant 0 : index
    %c0_19 = arith.constant 0 : index
    %c0_20 = arith.constant 0 : index
    %c0_21 = arith.constant 0 : index
    %25 = vector.load %arg6[%c0_18, %c0_19, %c0_20, %c0_21] : memref<1x16x16x64xbf16, #tpu.memory_space<vmem>>, vector<1x16x16x64xbf16>
    %26 = vector.shape_cast %25 : vector<1x16x16x64xbf16> to vector<16x16x64xbf16>
    %27 = vector.shape_cast %24 : vector<16x16x64xbf16> to vector<1x16x16x64xbf16>
    tpu.vector_store %arg6[%c0_18, %c0_19, %c0_20, %c0_21], %27 {strides = array<i32>} : memref<1x16x16x64xbf16, #tpu.memory_space<vmem>>, vector<1x16x16x64xbf16>,
    return
  }
  func.func @transform_0(%arg0: i32, %arg1: i32) -> (i32, i32, i32, i32) {
    %c0_i32 = arith.constant 0 : i32
    %c0_i32_0 = arith.constant 0 : i32
    %c0_i32_1 = arith.constant 0 : i32
    return %arg0, %arg1, %c0_i32, %c0_i32_0 : i32, i32, i32, i32
  }
  func.func @transform_1(%arg0: i32, %arg1: i32) -> (i32, i32) {
    %c0_i32 = arith.constant 0 : i32
    %c0_i32_0 = arith.constant 0 : i32
    %c0_i32_1 = arith.constant 0 : i32
    return %c0_i32, %c0_i32_0 : i32, i32
  }
  func.func @transform_2(%arg0: i32, %arg1: i32) -> (i32, i32) {
    %c0_i32 = arith.constant 0 : i32
    %c0_i32_0 = arith.constant 0 : i32
    %c0_i32_1 = arith.constant 0 : i32
    return %c0_i32, %c0_i32_0 : i32, i32
  }
  func.func @transform_3(%arg0: i32, %arg1: i32) -> (i32, i32) {
    %c0_i32 = arith.constant 0 : i32
    %c0_i32_0 = arith.constant 0 : i32
    %c0_i32_1 = arith.constant 0 : i32
    return %c0_i32, %c0_i32_0 : i32, i32
  }
  func.func @transform_4(%arg0: i32, %arg1: i32) -> (i32, i32, i32, i32) {
    %c0_i32 = arith.constant 0 : i32
    %c0_i32_0 = arith.constant 0 : i32
    %c0_i32_1 = arith.constant 0 : i32
    return %arg0, %arg1, %c0_i32, %c0_i32_0 : i32, i32, i32, i32
  }
}

</mosaic_0001>

<llo_original>
// kernel: tpu_custom_call.1
$region0: #{tpu_custom_call.1}
  #allocation0 [shape = 'u32[]', space=smem, size = 0x4, offset = 0x4, fixed_abs, tag = 'smem constant byte address 0x4 - core index']
  #allocation1 [shape = 'u32[144,128]{1,0:T(1,128)}', space=vmem, size = 0x12000, scoped, tag = 'internal scratch']
  #allocation2 [shape = 'f32[16,32,64]{2,1,0:T(8,128)}', space=vmem, size = 0x40000, scoped, tag = 'scratch operand']
  %s0 = inlined_call_operand.hbm [shape: bf16[2,32,32,256], index: 0, kind: input, shape index: {}]
  %s1 = inlined_call_operand.vmem [shape: bf16[256,64], index: 1, kind: input, shape index: {}]
  %s2 = inlined_call_operand.vmem [shape: f32[1,64], index: 2, kind: input, shape index: {}]
  %s3 = inlined_call_operand.vmem [shape: f32[1,64], index: 3, kind: input, shape index: {}]
  %s4 = inlined_call_operand.hbm [shape: bf16[2,16,16,64], index: 4, kind: output, shape index: {}]
  %s5 = sld [smem:[#allocation0]]
  $region53: #{tpu_custom_call.1} parent=0
    _
  %s7 = ssub.s32 1, %s5
  %s8 = scalar_select 0, %s7, %s5
  $region1: #{tpu_custom_call.1} parent=0
    #allocation3 [shape = 'u8[1048576]{0}', space=vmem, size = 0x100000, scoped, tag = 'input window, operand 0']
    #allocation4 [shape = 's32[2]{0}', space=sflag, size = 0x8, scoped, tag = 'scoped memory for tpu_custom_call.1']
    #allocation5 [shape = 's32[2]{0}', space=sflag, size = 0x8, scoped, tag = 'scoped memory for tpu_custom_call.1']
    #allocation6 [shape = 'u8[131072]{0}', space=vmem, size = 0x20000, scoped, tag = 'output window, operand 0']
    %9 = vsyncpa [#allocation4], 0
    %s10 = scalar_lea.sflag [#allocation4], 1
    %11 = vsyncpa %s10, 0
    %12 = vsyncpa [#allocation5], 0
    %s13 = scalar_lea.sflag [#allocation5], 1
    %14 = vsyncpa %s13, 0
    loop: start=0, step=1, limit=4
    $region2: #{tpu_custom_call.1} parent=1 // loop_pre_header
      _
    $region3: #{tpu_custom_call.1} parent=1 // loop_header
      %s16 = sphi 0, %s20
      %p17 = scmp.ge.s32.totalorder %s16, 4
      %s23 = sphi 0, %s35
      %s24 = sphi 0, %s31
      %s25 = sphi 0, %s23
      %s26 = sphi 0, %s24
      %s27 = sphi 0, %s25
      %s28 = sphi 0, %s26
      %s40 = sphi 0, %s42
      %s43 = sphi 0, %s40
      %s44 = sphi 0, %s43
      %s60 = sphi 0, %s44
      %s64 = sphi 0, %s64
      %s66 = sphi 0, %s64
      %s67 = sphi 0, %s66
      %s81 = sphi 0, %s67
      %s85 = sphi 0, %s85
      %s87 = sphi 0, %s85
      %s88 = sphi 0, %s87
      %s102 = sphi 0, %s88
      %s106 = sphi 0, %s106
      %s108 = sphi 0, %s106
      %s109 = sphi 0, %s108
      %s123 = sphi 0, %s109
      %s131 = sphi 0, %s133
      %s134 = sphi 0, %s131
      %s135 = sphi 0, %s134
      %s151 = sphi 0, %s135
    $region4: #{tpu_custom_call.1} parent=1 // loop_header_branch
      %19 = sbr.rel (%p17) target = $region8
    $region5: #{tpu_custom_call.1} parent=1 // loop_body
      %s21 = ssub.s32 %s16, 1
      %s22 = ssub.s32 %s16, 2
      %s29 = sadd.s32 1, %s24
      %p30 = scmp.ge.s32.totalorder %s29, 1
      %s31 = scalar_select %p30, 0, %s29
      %s32 = sadd.s32 1, %s23
      %s33 = scalar_select %p30, %s32, %s23
      %p34 = scmp.ge.s32.totalorder %s33, 2
      %s35 = scalar_select %p34, 0, %s33
      %s36 = ssub.s32 %s23, %s35
      %s37 = ssub.s32 %s24, %s31
      %s38 = sor.u32 %s36, %s37
      %p39 = scmp.eq.s32.totalorder %s38, 0
      %s41 = sadd.s32 %s40, 1
      %s42 = scalar_select %p39, %s40, %s41
      %p45 = pneg %p39
      %p46 = scmp.eq.s32.totalorder %s16, 1
      %p47 = por %p45, %p46
      %p48 = scmp.ne.s32.totalorder %s40, %s43
      %p49 = scmp.eq.s32.totalorder %s16, 0
      %p50 = por %p48, %p49
      %p51 = scmp.ne.s32.totalorder %s40, %s43
      %p52 = scmp.eq.s32.totalorder %s21, 1
      %p53 = por %p51, %p52
      %p54 = scmp.ne.s32.totalorder %s43, %s44
      %p55 = scmp.eq.s32.totalorder %s21, 0
      %p56 = por %p54, %p55
      %p57 = scmp.ne.s32.totalorder %s43, %s44
      %p58 = scmp.eq.s32.totalorder %s22, 1
      %p59 = por %p57, %p58
      %p61 = scmp.ne.s32.totalorder %s44, %s60
      %p62 = scmp.eq.s32.totalorder %s22, 0
      %p63 = por %p61, %p62
      %s65 = sadd.s32 %s64, 1
      %p68 = scmp.eq.s32.totalorder %s16, 1
      %p69 = scmp.ne.s32.totalorder %s64, %s66
      %p70 = scmp.eq.s32.totalorder %s16, 0
      %p71 = por %p69, %p70
      %p72 = scmp.ne.s32.totalorder %s64, %s66
      %p73 = scmp.eq.s32.totalorder %s21, 1
      %p74 = por %p72, %p73
      %p75 = scmp.ne.s32.totalorder %s66, %s67
      %p76 = scmp.eq.s32.totalorder %s21, 0
      %p77 = por %p75, %p76
      %p78 = scmp.ne.s32.totalorder %s66, %s67
      %p79 = scmp.eq.s32.totalorder %s22, 1
      %p80 = por %p78, %p79
      %p82 = scmp.ne.s32.totalorder %s67, %s81
      %p83 = scmp.eq.s32.totalorder %s22, 0
      %p84 = por %p82, %p83
      %s86 = sadd.s32 %s85, 1
      %p89 = scmp.eq.s32.totalorder %s16, 1
      %p90 = scmp.ne.s32.totalorder %s85, %s87
      %p91 = scmp.eq.s32.totalorder %s16, 0
      %p92 = por %p90, %p91
      %p93 = scmp.ne.s32.totalorder %s85, %s87
      %p94 = scmp.eq.s32.totalorder %s21, 1
      %p95 = por %p93, %p94
      %p96 = scmp.ne.s32.totalorder %s87, %s88
      %p97 = scmp.eq.s32.totalorder %s21, 0
      %p98 = por %p96, %p97
      %p99 = scmp.ne.s32.totalorder %s87, %s88
      %p100 = scmp.eq.s32.totalorder %s22, 1
      %p101 = por %p99, %p100
      %p103 = scmp.ne.s32.totalorder %s88, %s102
      %p104 = scmp.eq.s32.totalorder %s22, 0
      %p105 = por %p103, %p104
      %s107 = sadd.s32 %s106, 1
      %p110 = scmp.eq.s32.totalorder %s16, 1
      %p111 = scmp.ne.s32.totalorder %s106, %s108
      %p112 = scmp.eq.s32.totalorder %s16, 0
      %p113 = por %p111, %p112
      %p114 = scmp.ne.s32.totalorder %s106, %s108
      %p115 = scmp.eq.s32.totalorder %s21, 1
      %p116 = por %p114, %p115
      %p117 = scmp.ne.s32.totalorder %s108, %s109
      %p118 = scmp.eq.s32.totalorder %s21, 0
      %p119 = por %p117, %p118
      %p120 = scmp.ne.s32.totalorder %s108, %s109
      %p121 = scmp.eq.s32.totalorder %s22, 1
      %p122 = por %p120, %p121
      %p124 = scmp.ne.s32.totalorder %s109, %s123
      %p125 = scmp.eq.s32.totalorder %s22, 0
      %p126 = por %p124, %p125
      %s127 = ssub.s32 %s23, %s35
      %s128 = ssub.s32 %s24, %s31
      %s129 = sor.u32 %s127, %s128
      %p130 = scmp.eq.s32.totalorder %s129, 0
      %s132 = sadd.s32 %s131, 1
      %s133 = scalar_select %p130, %s131, %s132
      %p136 = pneg %p130
      %p137 = scmp.eq.s32.totalorder %s16, 1
      %p138 = por %p136, %p137
      %p139 = scmp.ne.s32.totalorder %s131, %s134
      %p140 = scmp.eq.s32.totalorder %s16, 0
      %p141 = por %p139, %p140
      %p142 = scmp.ne.s32.totalorder %s131, %s134
      %p143 = scmp.eq.s32.totalorder %s21, 1
      %p144 = por %p142, %p143
      %p145 = scmp.ne.s32.totalorder %s134, %s135
      %p146 = scmp.eq.s32.totalorder %s21, 0
      %p147 = por %p145, %p146
      %p148 = scmp.ne.s32.totalorder %s134, %s135
      %p149 = scmp.eq.s32.totalorder %s22, 1
      %p150 = por %p148, %p149
      %p152 = scmp.ne.s32.totalorder %s135, %s151
      %p153 = scmp.eq.s32.totalorder %s22, 0
      %p154 = por %p152, %p153
      %p155 = scmp.le.s32.totalorder 1, %s16
      %p156 = scmp.lt.s32.totalorder %s16, 3
      %p157 = pnand %p155, %p156
      %p158 = pneg %p157
      // Predicated region
      $region9: #{tpu_custom_call.1} parent=5 // pred_check
        _
      $region10: #{tpu_custom_call.1} parent=5 // pred_check_branch
        %160 = sbr.rel (%p157) target = $region12
      $region11: #{tpu_custom_call.1} parent=5 // pred_region
        %s161 = ssub.s32 %s16, 1
        // Predicated region
        $region13: #{tpu_custom_call.1} parent=11 // pred_check
          %p162 = pneg %p77
        $region14: #{tpu_custom_call.1} parent=11 // pred_check_branch
          %164 = sbr.rel (%p162) target = $region16
        $region15: #{tpu_custom_call.1} parent=11 // pred_region
          _
        $region16: #{tpu_custom_call.1} parent=11 // pred_fallthru
          _
        // Predicated region
        $region17: #{tpu_custom_call.1} parent=11 // pred_check
          %p165 = pneg %p98
        $region18: #{tpu_custom_call.1} parent=11 // pred_check_branch
          %167 = sbr.rel (%p165) target = $region20
        $region19: #{tpu_custom_call.1} parent=11 // pred_region
          _
        $region20: #{tpu_custom_call.1} parent=11 // pred_fallthru
          _
        // Predicated region
        $region21: #{tpu_custom_call.1} parent=11 // pred_check
          %p168 = pneg %p119
        $region22: #{tpu_custom_call.1} parent=11 // pred_check_branch
          %170 = sbr.rel (%p168) target = $region24
        $region23: #{tpu_custom_call.1} parent=11 // pred_region
          _
        $region24: #{tpu_custom_call.1} parent=11 // pred_fallthru
          _
      $region12: #{tpu_custom_call.1} parent=5 // pred_fallthru
        _
      %p171 = scmp.lt.s32.totalorder %s16, 2
      // Predicated region
      $region25: #{tpu_custom_call.1} parent=5 // pred_check
        %p172 = pneg %p171
      $region26: #{tpu_custom_call.1} parent=5 // pred_check_branch
        %174 = sbr.rel (%p172) target = $region28
      $region27: #{tpu_custom_call.1} parent=5 // pred_region
        // Predicated region
        $region29: #{tpu_custom_call.1} parent=27 // pred_check
          %p175 = pneg %p50
        $region30: #{tpu_custom_call.1} parent=27 // pred_check_branch
          %177 = sbr.rel (%p175) target = $region32
        $region31: #{tpu_custom_call.1} parent=27 // pred_region
          %s178 = sand.u32 %s40, 1
          %s179 = scalar_lea.sflag [#allocation4], %s178
          %s180 = sand.u32 %s40, 1
          %s181 = smul.addr %s180, 1024
          %s182 = scalar_lea.vmem [#allocation3], %s181
          %s183 = smul.u32 32, %s24
          %s185 = ssub.s32 16384, 16384
          %186 = vsyncadd %s179, %s185
          %s187 = smul.addr %s183, 8
          %s188 = smul.addr %s23, 256
          %s189 = sadd.s32 %s187, %s188
          %s190 = smul.addr %s189, 64
          %s191 = scalar_lea.hbm %s0, %s190
          %s192 = sshll.u32 %s182, 4
          %s193 = int_to_ptr.vmem [resolvable:$true] %s192
          %198 = dma.hbm_to_vmem [thread:$0]  %s191, 16384, %s193, %s179, 128, 128, 8
        $region32: #{tpu_custom_call.1} parent=27 // pred_fallthru
          _
      $region28: #{tpu_custom_call.1} parent=5 // pred_fallthru
        _
      %p199 = scmp.le.s32.totalorder 1, %s16
      %p200 = scmp.lt.s32.totalorder %s16, 3
      %p201 = pnand %p199, %p200
      %p202 = pneg %p201
      // Predicated region
      $region33: #{tpu_custom_call.1} parent=5 // pred_check
        _
      $region34: #{tpu_custom_call.1} parent=5 // pred_check_branch
        %204 = sbr.rel (%p201) target = $region36
      $region35: #{tpu_custom_call.1} parent=5 // pred_region
        %s205 = ssub.s32 %s16, 1
        %s206 = sand.u32 %s43, 1
        %s207 = scalar_lea.sflag [#allocation4], %s206
        %s208 = sand.u32 %s43, 1
        %s209 = smul.addr %s208, 1024
        %s210 = scalar_lea.vmem [#allocation3], %s209
        // Predicated region
        $region37: #{tpu_custom_call.1} parent=35 // pred_check
          %p211 = pneg %p56
        $region38: #{tpu_custom_call.1} parent=35 // pred_check_branch
          %213 = sbr.rel (%p211) target = $region40
        $region39: #{tpu_custom_call.1} parent=35 // pred_region
          %214 = dma.done %s207, 16384
        $region40: #{tpu_custom_call.1} parent=35 // pred_fallthru
          _
        %s215 = sand.u32 %s43, 1
        %s216 = scalar_lea.sflag [#allocation4], %s215
        %s217 = sand.u32 %s43, 1
        %s218 = smul.addr %s217, 1024
        %s219 = scalar_lea.vmem [#allocation3], %s218
        %p220 = pneg %p56
        %p221 = pneg %p53
        %p222 = pneg %p77
        %p223 = pneg %p74
        %p224 = pneg %p98
        %p225 = pneg %p95
        %p226 = pneg %p119
        %p227 = pneg %p116
        %p228 = pneg %p147
        %p229 = pneg %p144
        %s230 = sand.u32 %s134, 1
        %s231 = scalar_lea.sflag [#allocation5], %s230
        %s232 = sand.u32 %s134, 1
        %s233 = smul.addr %s232, 128
        %s234 = scalar_lea.vmem [#allocation6], %s233
        %s235 = smul.u32 32, %s26
        %s236 = smul.u32 16, %s26
        %v238 = vld [vmem:[%s210] sm:$0xff]
        %v239 = vld [vmem:[%s210 + $0x8] sm:$0xff]
        %v240 = vld [vmem:[%s210 + $0x10] sm:$0xff]
        %v241 = vld [vmem:[%s210 + $0x18] sm:$0xff]
        %v242 = vld [vmem:[%s210 + $0x20] sm:$0xff]
        %v243 = vld [vmem:[%s210 + $0x28] sm:$0xff]
        %v244 = vld [vmem:[%s210 + $0x30] sm:$0xff]
        %v245 = vld [vmem:[%s210 + $0x38] sm:$0xff]
        %v246 = vld [vmem:[%s210 + $0x40] sm:$0xff]
        %v247 = vld [vmem:[%s210 + $0x48] sm:$0xff]
        %v248 = vld [vmem:[%s210 + $0x50] sm:$0xff]
        %v249 = vld [vmem:[%s210 + $0x58] sm:$0xff]
        %v250 = vld [vmem:[%s210 + $0x60] sm:$0xff]
        %v251 = vld [vmem:[%s210 + $0x68] sm:$0xff]
        %v252 = vld [vmem:[%s210 + $0x70] sm:$0xff]
        %v253 = vld [vmem:[%s210 + $0x78] sm:$0xff]
        %v254 = vld [vmem:[%s210 + $0x80] sm:$0xff]
        %v255 = vld [vmem:[%s210 + $0x88] sm:$0xff]
        %v256 = vld [vmem:[%s210 + $0x90] sm:$0xff]
        %v257 = vld [vmem:[%s210 + $0x98] sm:$0xff]
        %v258 = vld [vmem:[%s210 + $0xa0] sm:$0xff]
        %v259 = vld [vmem:[%s210 + $0xa8] sm:$0xff]
        %v260 = vld [vmem:[%s210 + $0xb0] sm:$0xff]
        %v261 = vld [vmem:[%s210 + $0xb8] sm:$0xff]
        %v262 = vld [vmem:[%s210 + $0xc0] sm:$0xff]
        %v263 = vld [vmem:[%s210 + $0xc8] sm:$0xff]
        %v264 = vld [vmem:[%s210 + $0xd0] sm:$0xff]
        %v265 = vld [vmem:[%s210 + $0xd8] sm:$0xff]
        %v266 = vld [vmem:[%s210 + $0xe0] sm:$0xff]
        %v267 = vld [vmem:[%s210 + $0xe8] sm:$0xff]
        %v268 = vld [vmem:[%s210 + $0xf0] sm:$0xff]
        %v269 = vld [vmem:[%s210 + $0xf8] sm:$0xff]
        %v270 = vld [vmem:[%s210 + $0x100] sm:$0xff]
        %v271 = vld [vmem:[%s210 + $0x108] sm:$0xff]
        %v272 = vld [vmem:[%s210 + $0x110] sm:$0xff]
        %v273 = vld [vmem:[%s210 + $0x118] sm:$0xff]
        %v274 = vld [vmem:[%s210 + $0x120] sm:$0xff]
        %v275 = vld [vmem:[%s210 + $0x128] sm:$0xff]
        %v276 = vld [vmem:[%s210 + $0x130] sm:$0xff]
        %v277 = vld [vmem:[%s210 + $0x138] sm:$0xff]
        %v278 = vld [vmem:[%s210 + $0x140] sm:$0xff]
        %v279 = vld [vmem:[%s210 + $0x148] sm:$0xff]
        %v280 = vld [vmem:[%s210 + $0x150] sm:$0xff]
        %v281 = vld [vmem:[%s210 + $0x158] sm:$0xff]
        %v282 = vld [vmem:[%s210 + $0x160] sm:$0xff]
        %v283 = vld [vmem:[%s210 + $0x168] sm:$0xff]
        %v284 = vld [vmem:[%s210 + $0x170] sm:$0xff]
        %v285 = vld [vmem:[%s210 + $0x178] sm:$0xff]
        %v286 = vld [vmem:[%s210 + $0x180] sm:$0xff]
        %v287 = vld [vmem:[%s210 + $0x188] sm:$0xff]
        %v288 = vld [vmem:[%s210 + $0x190] sm:$0xff]
        %v289 = vld [vmem:[%s210 + $0x198] sm:$0xff]
        %v290 = vld [vmem:[%s210 + $0x1a0] sm:$0xff]
        %v291 = vld [vmem:[%s210 + $0x1a8] sm:$0xff]
        %v292 = vld [vmem:[%s210 + $0x1b0] sm:$0xff]
        %v293 = vld [vmem:[%s210 + $0x1b8] sm:$0xff]
        %v294 = vld [vmem:[%s210 + $0x1c0] sm:$0xff]
        %v295 = vld [vmem:[%s210 + $0x1c8] sm:$0xff]
        %v296 = vld [vmem:[%s210 + $0x1d0] sm:$0xff]
        %v297 = vld [vmem:[%s210 + $0x1d8] sm:$0xff]
        %v298 = vld [vmem:[%s210 + $0x1e0] sm:$0xff]
        %v299 = vld [vmem:[%s210 + $0x1e8] sm:$0xff]
        %v300 = vld [vmem:[%s210 + $0x1f0] sm:$0xff]
        %v301 = vld [vmem:[%s210 + $0x1f8] sm:$0xff]
        %v302 = vld [vmem:[%s210 + $0x200] sm:$0xff]
        %v303 = vld [vmem:[%s210 + $0x208] sm:$0xff]
        %v304 = vld [vmem:[%s210 + $0x210] sm:$0xff]
        %v305 = vld [vmem:[%s210 + $0x218] sm:$0xff]
        %v306 = vld [vmem:[%s210 + $0x220] sm:$0xff]
        %v307 = vld [vmem:[%s210 + $0x228] sm:$0xff]
        %v308 = vld [vmem:[%s210 + $0x230] sm:$0xff]
        %v309 = vld [vmem:[%s210 + $0x238] sm:$0xff]
        %v310 = vld [vmem:[%s210 + $0x240] sm:$0xff]
        %v311 = vld [vmem:[%s210 + $0x248] sm:$0xff]
        %v312 = vld [vmem:[%s210 + $0x250] sm:$0xff]
        %v313 = vld [vmem:[%s210 + $0x258] sm:$0xff]
        %v314 = vld [vmem:[%s210 + $0x260] sm:$0xff]
        %v315 = vld [vmem:[%s210 + $0x268] sm:$0xff]
        %v316 = vld [vmem:[%s210 + $0x270] sm:$0xff]
        %v317 = vld [vmem:[%s210 + $0x278] sm:$0xff]
        %v318 = vld [vmem:[%s210 + $0x280] sm:$0xff]
        %v319 = vld [vmem:[%s210 + $0x288] sm:$0xff]
        %v320 = vld [vmem:[%s210 + $0x290] sm:$0xff]
        %v321 = vld [vmem:[%s210 + $0x298] sm:$0xff]
        %v322 = vld [vmem:[%s210 + $0x2a0] sm:$0xff]
        %v323 = vld [vmem:[%s210 + $0x2a8] sm:$0xff]
        %v324 = vld [vmem:[%s210 + $0x2b0] sm:$0xff]
        %v325 = vld [vmem:[%s210 + $0x2b8] sm:$0xff]
        %v326 = vld [vmem:[%s210 + $0x2c0] sm:$0xff]
        %v327 = vld [vmem:[%s210 + $0x2c8] sm:$0xff]
        %v328 = vld [vmem:[%s210 + $0x2d0] sm:$0xff]
        %v329 = vld [vmem:[%s210 + $0x2d8] sm:$0xff]
        %v330 = vld [vmem:[%s210 + $0x2e0] sm:$0xff]
        %v331 = vld [vmem:[%s210 + $0x2e8] sm:$0xff]
        %v332 = vld [vmem:[%s210 + $0x2f0] sm:$0xff]
        %v333 = vld [vmem:[%s210 + $0x2f8] sm:$0xff]
        %v334 = vld [vmem:[%s210 + $0x300] sm:$0xff]
        %v335 = vld [vmem:[%s210 + $0x308] sm:$0xff]
        %v336 = vld [vmem:[%s210 + $0x310] sm:$0xff]
        %v337 = vld [vmem:[%s210 + $0x318] sm:$0xff]
        %v338 = vld [vmem:[%s210 + $0x320] sm:$0xff]
        %v339 = vld [vmem:[%s210 + $0x328] sm:$0xff]
        %v340 = vld [vmem:[%s210 + $0x330] sm:$0xff]
        %v341 = vld [vmem:[%s210 + $0x338] sm:$0xff]
        %v342 = vld [vmem:[%s210 + $0x340] sm:$0xff]
        %v343 = vld [vmem:[%s210 + $0x348] sm:$0xff]
        %v344 = vld [vmem:[%s210 + $0x350] sm:$0xff]
        %v345 = vld [vmem:[%s210 + $0x358] sm:$0xff]
        %v346 = vld [vmem:[%s210 + $0x360] sm:$0xff]
        %v347 = vld [vmem:[%s210 + $0x368] sm:$0xff]
        %v348 = vld [vmem:[%s210 + $0x370] sm:$0xff]
        %v349 = vld [vmem:[%s210 + $0x378] sm:$0xff]
        %v350 = vld [vmem:[%s210 + $0x380] sm:$0xff]
        %v351 = vld [vmem:[%s210 + $0x388] sm:$0xff]
        %v352 = vld [vmem:[%s210 + $0x390] sm:$0xff]
        %v353 = vld [vmem:[%s210 + $0x398] sm:$0xff]
        %v354 = vld [vmem:[%s210 + $0x3a0] sm:$0xff]
        %v355 = vld [vmem:[%s210 + $0x3a8] sm:$0xff]
        %v356 = vld [vmem:[%s210 + $0x3b0] sm:$0xff]
        %v357 = vld [vmem:[%s210 + $0x3b8] sm:$0xff]
        %v358 = vld [vmem:[%s210 + $0x3c0] sm:$0xff]
        %v359 = vld [vmem:[%s210 + $0x3c8] sm:$0xff]
        %v360 = vld [vmem:[%s210 + $0x3d0] sm:$0xff]
        %v361 = vld [vmem:[%s210 + $0x3d8] sm:$0xff]
        %v362 = vld [vmem:[%s210 + $0x3e0] sm:$0xff]
        %v363 = vld [vmem:[%s210 + $0x3e8] sm:$0xff]
        %v364 = vld [vmem:[%s210 + $0x3f0] sm:$0xff]
        %v365 = vld [vmem:[%s210 + $0x3f8] sm:$0xff]
        %v366 = vld [vmem:[%s1] sm:$0xf]
        %v367 = vld [vmem:[%s1 + $0x4] sm:$0xf]
        %v368 = vld [vmem:[%s1 + $0x8] sm:$0xf]
        %v369 = vld [vmem:[%s1 + $0xc] sm:$0xf]
        %v370 = vld [vmem:[%s1 + $0x10] sm:$0xf]
        %v371 = vld [vmem:[%s1 + $0x14] sm:$0xf]
        %v372 = vld [vmem:[%s1 + $0x18] sm:$0xf]
        %v373 = vld [vmem:[%s1 + $0x1c] sm:$0xf]
        %v374 = vld [vmem:[%s1 + $0x20] sm:$0xf]
        %v375 = vld [vmem:[%s1 + $0x24] sm:$0xf]
        %v376 = vld [vmem:[%s1 + $0x28] sm:$0xf]
        %v377 = vld [vmem:[%s1 + $0x2c] sm:$0xf]
        %v378 = vld [vmem:[%s1 + $0x30] sm:$0xf]
        %v379 = vld [vmem:[%s1 + $0x34] sm:$0xf]
        %v380 = vld [vmem:[%s1 + $0x38] sm:$0xf]
        %v381 = vld [vmem:[%s1 + $0x3c] sm:$0xf]
        %v382 = vld [vmem:[%s1 + $0x40] sm:$0xf]
        %v383 = vld [vmem:[%s1 + $0x44] sm:$0xf]
        %v384 = vld [vmem:[%s1 + $0x48] sm:$0xf]
        %v385 = vld [vmem:[%s1 + $0x4c] sm:$0xf]
        %v386 = vld [vmem:[%s1 + $0x50] sm:$0xf]
        %v387 = vld [vmem:[%s1 + $0x54] sm:$0xf]
        %v388 = vld [vmem:[%s1 + $0x58] sm:$0xf]
        %v389 = vld [vmem:[%s1 + $0x5c] sm:$0xf]
        %v390 = vld [vmem:[%s1 + $0x60] sm:$0xf]
        %v391 = vld [vmem:[%s1 + $0x64] sm:$0xf]
        %v392 = vld [vmem:[%s1 + $0x68] sm:$0xf]
        %v393 = vld [vmem:[%s1 + $0x6c] sm:$0xf]
        %v394 = vld [vmem:[%s1 + $0x70] sm:$0xf]
        %v395 = vld [vmem:[%s1 + $0x74] sm:$0xf]
        %v396 = vld [vmem:[%s1 + $0x78] sm:$0xf]
        %v397 = vld [vmem:[%s1 + $0x7c] sm:$0xf]
        %v526 = vunpack.c.l.b16 %v238
        %v527 = vunpack.c.h.b16 %v238
        %v528 = vunpack.c.l.b16 %v239
        %v529 = vunpack.c.h.b16 %v239
        %v530 = vunpack.c.l.b16 %v240
        %v531 = vunpack.c.h.b16 %v240
        %v532 = vunpack.c.l.b16 %v241
        %v533 = vunpack.c.h.b16 %v241
        %v534 = vunpack.c.l.b16 %v242
        %v535 = vunpack.c.h.b16 %v242
        %v536 = vunpack.c.l.b16 %v243
        %v537 = vunpack.c.h.b16 %v243
        %v538 = vunpack.c.l.b16 %v244
        %v539 = vunpack.c.h.b16 %v244
        %v540 = vunpack.c.l.b16 %v245
        %v541 = vunpack.c.h.b16 %v245
        %v542 = vunpack.c.l.b16 %v246
        %v543 = vunpack.c.h.b16 %v246
        %v544 = vunpack.c.l.b16 %v247
        %v545 = vunpack.c.h.b16 %v247
        %v546 = vunpack.c.l.b16 %v248
        %v547 = vunpack.c.h.b16 %v248
        %v548 = vunpack.c.l.b16 %v249
        %v549 = vunpack.c.h.b16 %v249
        %v550 = vunpack.c.l.b16 %v250
        %v551 = vunpack.c.h.b16 %v250
        %v552 = vunpack.c.l.b16 %v251
        %v553 = vunpack.c.h.b16 %v251
        %v554 = vunpack.c.l.b16 %v252
        %v555 = vunpack.c.h.b16 %v252
        %v556 = vunpack.c.l.b16 %v253
        %v557 = vunpack.c.h.b16 %v253
        %v558 = vunpack.c.l.b16 %v254
        %v559 = vunpack.c.h.b16 %v254
        %v560 = vunpack.c.l.b16 %v255
        %v561 = vunpack.c.h.b16 %v255
        %v562 = vunpack.c.l.b16 %v256
        %v563 = vunpack.c.h.b16 %v256
        %v564 = vunpack.c.l.b16 %v257
        %v565 = vunpack.c.h.b16 %v257
        %v566 = vunpack.c.l.b16 %v258
        %v567 = vunpack.c.h.b16 %v258
        %v568 = vunpack.c.l.b16 %v259
        %v569 = vunpack.c.h.b16 %v259
        %v570 = vunpack.c.l.b16 %v260
        %v571 = vunpack.c.h.b16 %v260
        %v572 = vunpack.c.l.b16 %v261
        %v573 = vunpack.c.h.b16 %v261
        %v574 = vunpack.c.l.b16 %v262
        %v575 = vunpack.c.h.b16 %v262
        %v576 = vunpack.c.l.b16 %v263
        %v577 = vunpack.c.h.b16 %v263
        %v578 = vunpack.c.l.b16 %v264
        %v579 = vunpack.c.h.b16 %v264
        %v580 = vunpack.c.l.b16 %v265
        %v581 = vunpack.c.h.b16 %v265
        %v582 = vunpack.c.l.b16 %v266
        %v583 = vunpack.c.h.b16 %v266
        %v584 = vunpack.c.l.b16 %v267
        %v585 = vunpack.c.h.b16 %v267
        %v586 = vunpack.c.l.b16 %v268
        %v587 = vunpack.c.h.b16 %v268
        %v588 = vunpack.c.l.b16 %v269
        %v589 = vunpack.c.h.b16 %v269
        %v590 = vunpack.c.l.b16 %v270
        %v591 = vunpack.c.h.b16 %v270
        %v592 = vunpack.c.l.b16 %v271
        %v593 = vunpack.c.h.b16 %v271
        %v594 = vunpack.c.l.b16 %v272
        %v595 = vunpack.c.h.b16 %v272
        %v596 = vunpack.c.l.b16 %v273
        %v597 = vunpack.c.h.b16 %v273
        %v598 = vunpack.c.l.b16 %v274
        %v599 = vunpack.c.h.b16 %v274
        %v600 = vunpack.c.l.b16 %v275
        %v601 = vunpack.c.h.b16 %v275
        %v602 = vunpack.c.l.b16 %v276
        %v603 = vunpack.c.h.b16 %v276
        %v604 = vunpack.c.l.b16 %v277
        %v605 = vunpack.c.h.b16 %v277
        %v606 = vunpack.c.l.b16 %v278
        %v607 = vunpack.c.h.b16 %v278
        %v608 = vunpack.c.l.b16 %v279
        %v609 = vunpack.c.h.b16 %v279
        %v610 = vunpack.c.l.b16 %v280
        %v611 = vunpack.c.h.b16 %v280
        %v612 = vunpack.c.l.b16 %v281
        %v613 = vunpack.c.h.b16 %v281
        %v614 = vunpack.c.l.b16 %v282
        %v615 = vunpack.c.h.b16 %v282
        %v616 = vunpack.c.l.b16 %v283
        %v617 = vunpack.c.h.b16 %v283
        %v618 = vunpack.c.l.b16 %v284
        %v619 = vunpack.c.h.b16 %v284
        %v620 = vunpack.c.l.b16 %v285
        %v621 = vunpack.c.h.b16 %v285
        %v622 = vunpack.c.l.b16 %v286
        %v623 = vunpack.c.h.b16 %v286
        %v624 = vunpack.c.l.b16 %v287
        %v625 = vunpack.c.h.b16 %v287
        %v626 = vunpack.c.l.b16 %v288
        %v627 = vunpack.c.h.b16 %v288
        %v628 = vunpack.c.l.b16 %v289
        %v629 = vunpack.c.h.b16 %v289
        %v630 = vunpack.c.l.b16 %v290
        %v631 = vunpack.c.h.b16 %v290
        %v632 = vunpack.c.l.b16 %v291
        %v633 = vunpack.c.h.b16 %v291
        %v634 = vunpack.c.l.b16 %v292
        %v635 = vunpack.c.h.b16 %v292
        %v636 = vunpack.c.l.b16 %v293
        %v637 = vunpack.c.h.b16 %v293
        %v638 = vunpack.c.l.b16 %v294
        %v639 = vunpack.c.h.b16 %v294
        %v640 = vunpack.c.l.b16 %v295
        %v641 = vunpack.c.h.b16 %v295
        %v642 = vunpack.c.l.b16 %v296
        %v643 = vunpack.c.h.b16 %v296
        %v644 = vunpack.c.l.b16 %v297
        %v645 = vunpack.c.h.b16 %v297
        %v646 = vunpack.c.l.b16 %v298
        %v647 = vunpack.c.h.b16 %v298
        %v648 = vunpack.c.l.b16 %v299
        %v649 = vunpack.c.h.b16 %v299
        %v650 = vunpack.c.l.b16 %v300
        %v651 = vunpack.c.h.b16 %v300
        %v652 = vunpack.c.l.b16 %v301
        %v653 = vunpack.c.h.b16 %v301
        %v654 = vunpack.c.l.b16 %v302
        %v655 = vunpack.c.h.b16 %v302
        %v656 = vunpack.c.l.b16 %v303
        %v657 = vunpack.c.h.b16 %v303
        %v658 = vunpack.c.l.b16 %v304
        %v659 = vunpack.c.h.b16 %v304
        %v660 = vunpack.c.l.b16 %v305
        %v661 = vunpack.c.h.b16 %v305
        %v662 = vunpack.c.l.b16 %v306
        %v663 = vunpack.c.h.b16 %v306
        %v664 = vunpack.c.l.b16 %v307
        %v665 = vunpack.c.h.b16 %v307
        %v666 = vunpack.c.l.b16 %v308
        %v667 = vunpack.c.h.b16 %v308
        %v668 = vunpack.c.l.b16 %v309
        %v669 = vunpack.c.h.b16 %v309
        %v670 = vunpack.c.l.b16 %v310
        %v671 = vunpack.c.h.b16 %v310
        %v672 = vunpack.c.l.b16 %v311
        %v673 = vunpack.c.h.b16 %v311
        %v674 = vunpack.c.l.b16 %v312
        %v675 = vunpack.c.h.b16 %v312
        %v676 = vunpack.c.l.b16 %v313
        %v677 = vunpack.c.h.b16 %v313
        %v678 = vunpack.c.l.b16 %v314
        %v679 = vunpack.c.h.b16 %v314
        %v680 = vunpack.c.l.b16 %v315
        %v681 = vunpack.c.h.b16 %v315
        %v682 = vunpack.c.l.b16 %v316
        %v683 = vunpack.c.h.b16 %v316
        %v684 = vunpack.c.l.b16 %v317
        %v685 = vunpack.c.h.b16 %v317
        %v686 = vunpack.c.l.b16 %v318
        %v687 = vunpack.c.h.b16 %v318
        %v688 = vunpack.c.l.b16 %v319
        %v689 = vunpack.c.h.b16 %v319
        %v690 = vunpack.c.l.b16 %v320
        %v691 = vunpack.c.h.b16 %v320
        %v692 = vunpack.c.l.b16 %v321
        %v693 = vunpack.c.h.b16 %v321
        %v694 = vunpack.c.l.b16 %v322
        %v695 = vunpack.c.h.b16 %v322
        %v696 = vunpack.c.l.b16 %v323
        %v697 = vunpack.c.h.b16 %v323
        %v698 = vunpack.c.l.b16 %v324
        %v699 = vunpack.c.h.b16 %v324
        %v700 = vunpack.c.l.b16 %v325
        %v701 = vunpack.c.h.b16 %v325
        %v702 = vunpack.c.l.b16 %v326
        %v703 = vunpack.c.h.b16 %v326
        %v704 = vunpack.c.l.b16 %v327
        %v705 = vunpack.c.h.b16 %v327
        %v706 = vunpack.c.l.b16 %v328
        %v707 = vunpack.c.h.b16 %v328
        %v708 = vunpack.c.l.b16 %v329
        %v709 = vunpack.c.h.b16 %v329
        %v710 = vunpack.c.l.b16 %v330
        %v711 = vunpack.c.h.b16 %v330
        %v712 = vunpack.c.l.b16 %v331
        %v713 = vunpack.c.h.b16 %v331
        %v714 = vunpack.c.l.b16 %v332
        %v715 = vunpack.c.h.b16 %v332
        %v716 = vunpack.c.l.b16 %v333
        %v717 = vunpack.c.h.b16 %v333
        %v718 = vunpack.c.l.b16 %v334
        %v719 = vunpack.c.h.b16 %v334
        %v720 = vunpack.c.l.b16 %v335
        %v721 = vunpack.c.h.b16 %v335
        %v722 = vunpack.c.l.b16 %v336
        %v723 = vunpack.c.h.b16 %v336
        %v724 = vunpack.c.l.b16 %v337
        %v725 = vunpack.c.h.b16 %v337
        %v726 = vunpack.c.l.b16 %v338
        %v727 = vunpack.c.h.b16 %v338
        %v728 = vunpack.c.l.b16 %v339
        %v729 = vunpack.c.h.b16 %v339
        %v730 = vunpack.c.l.b16 %v340
        %v731 = vunpack.c.h.b16 %v340
        %v732 = vunpack.c.l.b16 %v341
        %v733 = vunpack.c.h.b16 %v341
        %v734 = vunpack.c.l.b16 %v342
        %v735 = vunpack.c.h.b16 %v342
        %v736 = vunpack.c.l.b16 %v343
        %v737 = vunpack.c.h.b16 %v343
        %v738 = vunpack.c.l.b16 %v344
        %v739 = vunpack.c.h.b16 %v344
        %v740 = vunpack.c.l.b16 %v345
        %v741 = vunpack.c.h.b16 %v345
        %v742 = vunpack.c.l.b16 %v346
        %v743 = vunpack.c.h.b16 %v346
        %v744 = vunpack.c.l.b16 %v347
        %v745 = vunpack.c.h.b16 %v347
        %v746 = vunpack.c.l.b16 %v348
        %v747 = vunpack.c.h.b16 %v348
        %v748 = vunpack.c.l.b16 %v349
        %v749 = vunpack.c.h.b16 %v349
        %v750 = vunpack.c.l.b16 %v350
        %v751 = vunpack.c.h.b16 %v350
        %v752 = vunpack.c.l.b16 %v351
        %v753 = vunpack.c.h.b16 %v351
        %v754 = vunpack.c.l.b16 %v352
        %v755 = vunpack.c.h.b16 %v352
        %v756 = vunpack.c.l.b16 %v353
        %v757 = vunpack.c.h.b16 %v353
        %v758 = vunpack.c.l.b16 %v354
        %v759 = vunpack.c.h.b16 %v354
        %v760 = vunpack.c.l.b16 %v355
        %v761 = vunpack.c.h.b16 %v355
        %v762 = vunpack.c.l.b16 %v356
        %v763 = vunpack.c.h.b16 %v356
        %v764 = vunpack.c.l.b16 %v357
        %v765 = vunpack.c.h.b16 %v357
        %v766 = vunpack.c.l.b16 %v358
        %v767 = vunpack.c.h.b16 %v358
        %v768 = vunpack.c.l.b16 %v359
        %v769 = vunpack.c.h.b16 %v359
        %v770 = vunpack.c.l.b16 %v360
        %v771 = vunpack.c.h.b16 %v360
        %v772 = vunpack.c.l.b16 %v361
        %v773 = vunpack.c.h.b16 %v361
        %v774 = vunpack.c.l.b16 %v362
        %v775 = vunpack.c.h.b16 %v362
        %v776 = vunpack.c.l.b16 %v363
        %v777 = vunpack.c.h.b16 %v363
        %v778 = vunpack.c.l.b16 %v364
        %v779 = vunpack.c.h.b16 %v364
        %v780 = vunpack.c.l.b16 %v365
        %v781 = vunpack.c.h.b16 %v365
        %v782 = vpack.c.b16 %v528, %v526
        %v783 = vpack.c.b16 %v529, %v527
        %v784 = vpack.c.b16 %v532, %v530
        %v785 = vpack.c.b16 %v533, %v531
        %v786 = vpack.c.b16 %v536, %v534
        %v787 = vpack.c.b16 %v537, %v535
        %v788 = vpack.c.b16 %v540, %v538
        %v789 = vpack.c.b16 %v541, %v539
        %v790 = vpack.c.b16 %v544, %v542
        %v791 = vpack.c.b16 %v545, %v543
        %v792 = vpack.c.b16 %v548, %v546
        %v793 = vpack.c.b16 %v549, %v547
        %v794 = vpack.c.b16 %v552, %v550
        %v795 = vpack.c.b16 %v553, %v551
        %v796 = vpack.c.b16 %v556, %v554
        %v797 = vpack.c.b16 %v557, %v555
        %v798 = vpack.c.b16 %v560, %v558
        %v799 = vpack.c.b16 %v561, %v559
        %v800 = vpack.c.b16 %v564, %v562
        %v801 = vpack.c.b16 %v565, %v563
        %v802 = vpack.c.b16 %v568, %v566
        %v803 = vpack.c.b16 %v569, %v567
        %v804 = vpack.c.b16 %v572, %v570
        %v805 = vpack.c.b16 %v573, %v571
        %v806 = vpack.c.b16 %v576, %v574
        %v807 = vpack.c.b16 %v577, %v575
        %v808 = vpack.c.b16 %v580, %v578
        %v809 = vpack.c.b16 %v581, %v579
        %v810 = vpack.c.b16 %v584, %v582
        %v811 = vpack.c.b16 %v585, %v583
        %v812 = vpack.c.b16 %v588, %v586
        %v813 = vpack.c.b16 %v589, %v587
        %v814 = vpack.c.b16 %v592, %v590
        %v815 = vpack.c.b16 %v593, %v591
        %v816 = vpack.c.b16 %v596, %v594
        %v817 = vpack.c.b16 %v597, %v595
        %v818 = vpack.c.b16 %v600, %v598
        %v819 = vpack.c.b16 %v601, %v599
        %v820 = vpack.c.b16 %v604, %v602
        %v821 = vpack.c.b16 %v605, %v603
        %v822 = vpack.c.b16 %v608, %v606
        %v823 = vpack.c.b16 %v609, %v607
        %v824 = vpack.c.b16 %v612, %v610
        %v825 = vpack.c.b16 %v613, %v611
        %v826 = vpack.c.b16 %v616, %v614
        %v827 = vpack.c.b16 %v617, %v615
        %v828 = vpack.c.b16 %v620, %v618
        %v829 = vpack.c.b16 %v621, %v619
        %v830 = vpack.c.b16 %v624, %v622
        %v831 = vpack.c.b16 %v625, %v623
        %v832 = vpack.c.b16 %v628, %v626
        %v833 = vpack.c.b16 %v629, %v627
        %v834 = vpack.c.b16 %v632, %v630
        %v835 = vpack.c.b16 %v633, %v631
        %v836 = vpack.c.b16 %v636, %v634
        %v837 = vpack.c.b16 %v637, %v635
        %v838 = vpack.c.b16 %v640, %v638
        %v839 = vpack.c.b16 %v641, %v639
        %v840 = vpack.c.b16 %v644, %v642
        %v841 = vpack.c.b16 %v645, %v643
        %v842 = vpack.c.b16 %v648, %v646
        %v843 = vpack.c.b16 %v649, %v647
        %v844 = vpack.c.b16 %v652, %v650
        %v845 = vpack.c.b16 %v653, %v651
        %v846 = vpack.c.b16 %v656, %v654
        %v847 = vpack.c.b16 %v657, %v655
        %v848 = vpack.c.b16 %v660, %v658
        %v849 = vpack.c.b16 %v661, %v659
        %v850 = vpack.c.b16 %v664, %v662
        %v851 = vpack.c.b16 %v665, %v663
        %v852 = vpack.c.b16 %v668, %v666
        %v853 = vpack.c.b16 %v669, %v667
        %v854 = vpack.c.b16 %v672, %v670
        %v855 = vpack.c.b16 %v673, %v671
        %v856 = vpack.c.b16 %v676, %v674
        %v857 = vpack.c.b16 %v677, %v675
        %v858 = vpack.c.b16 %v680, %v678
        %v859 = vpack.c.b16 %v681, %v679
        %v860 = vpack.c.b16 %v684, %v682
        %v861 = vpack.c.b16 %v685, %v683
        %v862 = vpack.c.b16 %v688, %v686
        %v863 = vpack.c.b16 %v689, %v687
        %v864 = vpack.c.b16 %v692, %v690
        %v865 = vpack.c.b16 %v693, %v691
        %v866 = vpack.c.b16 %v696, %v694
        %v867 = vpack.c.b16 %v697, %v695
        %v868 = vpack.c.b16 %v700, %v698
        %v869 = vpack.c.b16 %v701, %v699
        %v870 = vpack.c.b16 %v704, %v702
        %v871 = vpack.c.b16 %v705, %v703
        %v872 = vpack.c.b16 %v708, %v706
        %v873 = vpack.c.b16 %v709, %v707
        %v874 = vpack.c.b16 %v712, %v710
        %v875 = vpack.c.b16 %v713, %v711
        %v876 = vpack.c.b16 %v716, %v714
        %v877 = vpack.c.b16 %v717, %v715
        %v878 = vpack.c.b16 %v720, %v718
        %v879 = vpack.c.b16 %v721, %v719
        %v880 = vpack.c.b16 %v724, %v722
        %v881 = vpack.c.b16 %v725, %v723
        %v882 = vpack.c.b16 %v728, %v726
        %v883 = vpack.c.b16 %v729, %v727
        %v884 = vpack.c.b16 %v732, %v730
        %v885 = vpack.c.b16 %v733, %v731
        %v886 = vpack.c.b16 %v736, %v734
        %v887 = vpack.c.b16 %v737, %v735
        %v888 = vpack.c.b16 %v740, %v738
        %v889 = vpack.c.b16 %v741, %v739
        %v890 = vpack.c.b16 %v744, %v742
        %v891 = vpack.c.b16 %v745, %v743
        %v892 = vpack.c.b16 %v748, %v746
        %v893 = vpack.c.b16 %v749, %v747
        %v894 = vpack.c.b16 %v752, %v750
        %v895 = vpack.c.b16 %v753, %v751
        %v896 = vpack.c.b16 %v756, %v754
        %v897 = vpack.c.b16 %v757, %v755
        %v898 = vpack.c.b16 %v760, %v758
        %v899 = vpack.c.b16 %v761, %v759
        %v900 = vpack.c.b16 %v764, %v762
        %v901 = vpack.c.b16 %v765, %v763
        %v902 = vpack.c.b16 %v768, %v766
        %v903 = vpack.c.b16 %v769, %v767
        %v904 = vpack.c.b16 %v772, %v770
        %v905 = vpack.c.b16 %v773, %v771
        %v906 = vpack.c.b16 %v776, %v774
        %v907 = vpack.c.b16 %v777, %v775
        %v908 = vpack.c.b16 %v780, %v778
        %v909 = vpack.c.b16 %v781, %v779
        %v1070 = vunpack.c.l.b16 %v366
        %v1071 = vunpack.c.l.b16 %v367
        %v1072 = vunpack.c.l.b16 %v368
        %v1073 = vunpack.c.l.b16 %v369
        %v1074 = vunpack.c.l.b16 %v370
        %v1075 = vunpack.c.l.b16 %v371
        %v1076 = vunpack.c.l.b16 %v372
        %v1077 = vunpack.c.l.b16 %v373
        %v1078 = vunpack.c.l.b16 %v374
        %v1079 = vunpack.c.l.b16 %v375
        %v1080 = vunpack.c.l.b16 %v376
        %v1081 = vunpack.c.l.b16 %v377
        %v1082 = vunpack.c.l.b16 %v378
        %v1083 = vunpack.c.l.b16 %v379
        %v1084 = vunpack.c.l.b16 %v380
        %v1085 = vunpack.c.l.b16 %v381
        %v1086 = vunpack.c.l.b16 %v382
        %v1087 = vunpack.c.l.b16 %v383
        %v1088 = vunpack.c.l.b16 %v384
        %v1089 = vunpack.c.l.b16 %v385
        %v1090 = vunpack.c.l.b16 %v386
        %v1091 = vunpack.c.l.b16 %v387
        %v1092 = vunpack.c.l.b16 %v388
        %v1093 = vunpack.c.l.b16 %v389
        %v1094 = vunpack.c.l.b16 %v390
        %v1095 = vunpack.c.l.b16 %v391
        %v1096 = vunpack.c.l.b16 %v392
        %v1097 = vunpack.c.l.b16 %v393
        %v1098 = vunpack.c.l.b16 %v394
        %v1099 = vunpack.c.l.b16 %v395
        %v1100 = vunpack.c.l.b16 %v396
        %v1101 = vunpack.c.l.b16 %v397
        %v1102 = vpack.c.b16 %v1071, %v1070
        %v1103 = vpack.c.b16 %v1073, %v1072
        %v1104 = vpack.c.b16 %v1075, %v1074
        %v1105 = vpack.c.b16 %v1077, %v1076
        %v1106 = vpack.c.b16 %v1079, %v1078
        %v1107 = vpack.c.b16 %v1081, %v1080
        %v1108 = vpack.c.b16 %v1083, %v1082
        %v1109 = vpack.c.b16 %v1085, %v1084
        %v1110 = vpack.c.b16 %v1087, %v1086
        %v1111 = vpack.c.b16 %v1089, %v1088
        %v1112 = vpack.c.b16 %v1091, %v1090
        %v1113 = vpack.c.b16 %v1093, %v1092
        %v1114 = vpack.c.b16 %v1095, %v1094
        %v1115 = vpack.c.b16 %v1097, %v1096
        %v1116 = vpack.c.b16 %v1099, %v1098
        %v1117 = vpack.c.b16 %v1101, %v1100
        %1134 = vmatprep.subr.bf16.mxu0 0
        %1135 = vmatpush1.bf16.msra.mxu0 %v1102
        %1136 = vmatprep.subr.bf16.mxu0 0
        %1137 = vmatpush1.bf16.msra.mxu0 %v1103
        %1138 = vmatprep.subr.bf16.mxu0 0
        %1139 = vmatpush1.bf16.msra.mxu0 %v1104
        %1140 = vmatprep.subr.bf16.mxu0 0
        %1141 = vmatpush1.bf16.msra.mxu0 %v1105
        %1142 = vmatprep.subr.bf16.mxu0 0
        %1143 = vmatpush1.bf16.msra.mxu0 %v1106
        %1144 = vmatprep.subr.bf16.mxu0 0
        %1145 = vmatpush1.bf16.msra.mxu0 %v1107
        %1146 = vmatprep.subr.bf16.mxu0 0
        %1147 = vmatpush1.bf16.msra.mxu0 %v1108
        %1148 = vmatprep.subr.bf16.mxu0 0
        %1149 = vmatpush1.bf16.msra.mxu0 %v1109
        %1150 = vmatprep.subr.bf16.mxu0 0
        %1151 = vmatpush1.bf16.msra.mxu0 %v1110
        %1152 = vmatprep.subr.bf16.mxu0 0
        %1153 = vmatpush1.bf16.msra.mxu0 %v1111
        %1154 = vmatprep.subr.bf16.mxu0 0
        %1155 = vmatpush1.bf16.msra.mxu0 %v1112
        %1156 = vmatprep.subr.bf16.mxu0 0
        %1157 = vmatpush1.bf16.msra.mxu0 %v1113
        %1158 = vmatprep.subr.bf16.mxu0 0
        %1159 = vmatpush1.bf16.msra.mxu0 %v1114
        %1160 = vmatprep.subr.bf16.mxu0 0
        %1161 = vmatpush1.bf16.msra.mxu0 %v1115
        %1162 = vmatprep.subr.bf16.mxu0 0
        %1163 = vmatpush1.bf16.msra.mxu0 %v1116
        %1164 = vmatprep.subr.bf16.mxu0 0
        %1165 = vmatpush1.bf16.msra.mxu0 %v1117
        %1166 = vmatprep.mubr.bf16.mxu0 %v783
        %1167 = vmatmul.mubr.bf16.gmra.mrb[0].mxu0 %v782
        %v1168 = vpop.f32.mrb[0].mxu0
        %v1169 = vadd.f32 0.0, %v1168
        %v1170 = vpop.f32.mrb[0].mxu0
        %v1171 = vpop.f32.mrb[0].mxu0
        %v1172 = vadd.f32 0.0, %v1171
        %v1173 = vpop.f32.mrb[0].mxu0
        %1174 = vmatprep.mubr.bf16.mxu0 %v785
        %1175 = vmatmul.mubr.bf16.gmra.mrb[0].mxu0 %v784
        %v1176 = vpop.f32.mrb[0].mxu0
        %v1177 = vadd.f32 0.0, %v1176
        %v1178 = vpop.f32.mrb[0].mxu0
        %v1179 = vpop.f32.mrb[0].mxu0
        %v1180 = vadd.f32 0.0, %v1179
        %v1181 = vpop.f32.mrb[0].mxu0
        %1182 = vmatprep.mubr.bf16.mxu0 %v787
        %1183 = vmatmul.mubr.bf16.gmra.mrb[0].mxu0 %v786
        %v1184 = vpop.f32.mrb[0].mxu0
        %v1185 = vadd.f32 0.0, %v1184
        %v1186 = vpop.f32.mrb[0].mxu0
        %v1187 = vpop.f32.mrb[0].mxu0
        %v1188 = vadd.f32 0.0, %v1187
        %v1189 = vpop.f32.mrb[0].mxu0
        %1190 = vmatprep.mubr.bf16.mxu0 %v789
        %1191 = vmatmul.mubr.bf16.gmra.mrb[0].mxu0 %v788
        %v1192 = vpop.f32.mrb[0].mxu0
        %v1193 = vadd.f32 0.0, %v1192
        %v1194 = vpop.f32.mrb[0].mxu0
        %v1195 = vpop.f32.mrb[0].mxu0
        %v1196 = vadd.f32 0.0, %v1195
        %v1197 = vpop.f32.mrb[0].mxu0
        %1198 = vmatprep.mubr.bf16.mxu0 %v791
        %1199 = vmatmul.mubr.bf16.gmra.mrb[0].mxu0 %v790
        %v1200 = vpop.f32.mrb[0].mxu0
        %v1201 = vadd.f32 0.0, %v1200
        %v1202 = vpop.f32.mrb[0].mxu0
        %v1203 = vpop.f32.mrb[0].mxu0
        %v1204 = vadd.f32 0.0, %v1203
        %v1205 = vpop.f32.mrb[0].mxu0
        %1206 = vmatprep.mubr.bf16.mxu0 %v793
        %1207 = vmatmul.mubr.bf16.gmra.mrb[0].mxu0 %v792
        %v1208 = vpop.f32.mrb[0].mxu0
        %v1209 = vadd.f32 0.0, %v1208
        %v1210 = vpop.f32.mrb[0].mxu0
        %v1211 = vpop.f32.mrb[0].mxu0
        %v1212 = vadd.f32 0.0, %v1211
        %v1213 = vpop.f32.mrb[0].mxu0
        %1214 = vmatprep.mubr.bf16.mxu0 %v795
        %1215 = vmatmul.mubr.bf16.gmra.mrb[0].mxu0 %v794
        %v1216 = vpop.f32.mrb[0].mxu0
        %v1217 = vadd.f32 0.0, %v1216
        %v1218 = vpop.f32.mrb[0].mxu0
        %v1219 = vpop.f32.mrb[0].mxu0
        %v1220 = vadd.f32 0.0, %v1219
        %v1221 = vpop.f32.mrb[0].mxu0
        %1222 = vmatprep.mubr.bf16.mxu0 %v797
        %1223 = vmatmul.mubr.bf16.gmra.mrb[0].mxu0 %v796
        %v1224 = vpop.f32.mrb[0].mxu0
        %v1225 = vadd.f32 0.0, %v1224
        %v1226 = vpop.f32.mrb[0].mxu0
        %v1227 = vpop.f32.mrb[0].mxu0
        %v1228 = vadd.f32 0.0, %v1227
        %v1229 = vpop.f32.mrb[0].mxu0
        %1230 = vmatprep.mubr.bf16.mxu0 %v799
        %1231 = vmatmul.mubr.bf16.gmra.mrb[0].mxu0 %v798
        %v1232 = vpop.f32.mrb[0].mxu0
        %v1233 = vadd.f32 0.0, %v1232
        %v1234 = vpop.f32.mrb[0].mxu0
        %v1235 = vpop.f32.mrb[0].mxu0
        %v1236 = vadd.f32 0.0, %v1235
        %v1237 = vpop.f32.mrb[0].mxu0
        %1238 = vmatprep.mubr.bf16.mxu0 %v801
        %1239 = vmatmul.mubr.bf16.gmra.mrb[0].mxu0 %v800
        %v1240 = vpop.f32.mrb[0].mxu0
        %v1241 = vadd.f32 0.0, %v1240
        %v1242 = vpop.f32.mrb[0].mxu0
        %v1243 = vpop.f32.mrb[0].mxu0
        %v1244 = vadd.f32 0.0, %v1243
        %v1245 = vpop.f32.mrb[0].mxu0
        %1246 = vmatprep.mubr.bf16.mxu0 %v803
        %1247 = vmatmul.mubr.bf16.gmra.mrb[0].mxu0 %v802
        %v1248 = vpop.f32.mrb[0].mxu0
        %v1249 = vadd.f32 0.0, %v1248
        %v1250 = vpop.f32.mrb[0].mxu0
        %v1251 = vpop.f32.mrb[0].mxu0
        %v1252 = vadd.f32 0.0, %v1251
        %v1253 = vpop.f32.mrb[0].mxu0
        %1254 = vmatprep.mubr.bf16.mxu0 %v805
        %1255 = vmatmul.mubr.bf16.gmra.mrb[0].mxu0 %v804
        %v1256 = vpop.f32.mrb[0].mxu0
        %v1257 = vadd.f32 0.0, %v1256
        %v1258 = vpop.f32.mrb[0].mxu0
        %v1259 = vpop.f32.mrb[0].mxu0
        %v1260 = vadd.f32 0.0, %v1259
        %v1261 = vpop.f32.mrb[0].mxu0
        %1262 = vmatprep.mubr.bf16.mxu0 %v807
        %1263 = vmatmul.mubr.bf16.gmra.mrb[0].mxu0 %v806
        %v1264 = vpop.f32.mrb[0].mxu0
        %v1265 = vadd.f32 0.0, %v1264
        %v1266 = vpop.f32.mrb[0].mxu0
        %v1267 = vpop.f32.mrb[0].mxu0
        %v1268 = vadd.f32 0.0, %v1267
        %v1269 = vpop.f32.mrb[0].mxu0
        %1270 = vmatprep.mubr.bf16.mxu0 %v809
        %1271 = vmatmul.mubr.bf16.gmra.mrb[0].mxu0 %v808
        %v1272 = vpop.f32.mrb[0].mxu0
        %v1273 = vadd.f32 0.0, %v1272
        %v1274 = vpop.f32.mrb[0].mxu0
        %v1275 = vpop.f32.mrb[0].mxu0
        %v1276 = vadd.f32 0.0, %v1275
        %v1277 = vpop.f32.mrb[0].mxu0
        %1278 = vmatprep.mubr.bf16.mxu0 %v811
        %1279 = vmatmul.mubr.bf16.gmra.mrb[0].mxu0 %v810
        %v1280 = vpop.f32.mrb[0].mxu0
        %v1281 = vadd.f32 0.0, %v1280
        %v1282 = vpop.f32.mrb[0].mxu0
        %v1283 = vpop.f32.mrb[0].mxu0
        %v1284 = vadd.f32 0.0, %v1283
        %v1285 = vpop.f32.mrb[0].mxu0
        %1286 = vmatprep.mubr.bf16.mxu0 %v813
        %1287 = vmatmul.mubr.bf16.gmra.mrb[0].mxu0 %v812
        %v1288 = vpop.f32.mrb[0].mxu0
        %v1289 = vadd.f32 0.0, %v1288
        %v1290 = vpop.f32.mrb[0].mxu0
        %v1291 = vpop.f32.mrb[0].mxu0
        %v1292 = vadd.f32 0.0, %v1291
        %v1293 = vpop.f32.mrb[0].mxu0
        %1294 = vmatprep.mubr.bf16.mxu0 %v815
        %1295 = vmatmul.mubr.bf16.gmra.mrb[0].mxu0 %v814
        %v1296 = vpop.f32.mrb[0].mxu0
        %v1297 = vadd.f32 0.0, %v1296
        %v1298 = vpop.f32.mrb[0].mxu0
        %v1299 = vpop.f32.mrb[0].mxu0
        %v1300 = vadd.f32 0.0, %v1299
        %v1301 = vpop.f32.mrb[0].mxu0
        %1302 = vmatprep.mubr.bf16.mxu0 %v817
        %1303 = vmatmul.mubr.bf16.gmra.mrb[0].mxu0 %v816
        %v1304 = vpop.f32.mrb[0].mxu0
        %v1305 = vadd.f32 0.0, %v1304
        %v1306 = vpop.f32.mrb[0].mxu0
        %v1307 = vpop.f32.mrb[0].mxu0
        %v1308 = vadd.f32 0.0, %v1307
        %v1309 = vpop.f32.mrb[0].mxu0
        %1310 = vmatprep.mubr.bf16.mxu0 %v819
        %1311 = vmatmul.mubr.bf16.gmra.mrb[0].mxu0 %v818
        %v1312 = vpop.f32.mrb[0].mxu0
        %v1313 = vadd.f32 0.0, %v1312
        %v1314 = vpop.f32.mrb[0].mxu0
        %v1315 = vpop.f32.mrb[0].mxu0
        %v1316 = vadd.f32 0.0, %v1315
        %v1317 = vpop.f32.mrb[0].mxu0
        %1318 = vmatprep.mubr.bf16.mxu0 %v821
        %1319 = vmatmul.mubr.bf16.gmra.mrb[0].mxu0 %v820
        %v1320 = vpop.f32.mrb[0].mxu0
        %v1321 = vadd.f32 0.0, %v1320
        %v1322 = vpop.f32.mrb[0].mxu0
        %v1323 = vpop.f32.mrb[0].mxu0
        %v1324 = vadd.f32 0.0, %v1323
        %v1325 = vpop.f32.mrb[0].mxu0
        %1326 = vmatprep.mubr.bf16.mxu0 %v823
        %1327 = vmatmul.mubr.bf16.gmra.mrb[0].mxu0 %v822
        %v1328 = vpop.f32.mrb[0].mxu0
        %v1329 = vadd.f32 0.0, %v1328
        %v1330 = vpop.f32.mrb[0].mxu0
        %v1331 = vpop.f32.mrb[0].mxu0
        %v1332 = vadd.f32 0.0, %v1331
        %v1333 = vpop.f32.mrb[0].mxu0
        %1334 = vmatprep.mubr.bf16.mxu0 %v825
        %1335 = vmatmul.mubr.bf16.gmra.mrb[0].mxu0 %v824
        %v1336 = vpop.f32.mrb[0].mxu0
        %v1337 = vadd.f32 0.0, %v1336
        %v1338 = vpop.f32.mrb[0].mxu0
        %v1339 = vpop.f32.mrb[0].mxu0
        %v1340 = vadd.f32 0.0, %v1339
        %v1341 = vpop.f32.mrb[0].mxu0
        %1342 = vmatprep.mubr.bf16.mxu0 %v827
        %1343 = vmatmul.mubr.bf16.gmra.mrb[0].mxu0 %v826
        %v1344 = vpop.f32.mrb[0].mxu0
        %v1345 = vadd.f32 0.0, %v1344
        %v1346 = vpop.f32.mrb[0].mxu0
        %v1347 = vpop.f32.mrb[0].mxu0
        %v1348 = vadd.f32 0.0, %v1347
        %v1349 = vpop.f32.mrb[0].mxu0
        %1350 = vmatprep.mubr.bf16.mxu0 %v829
        %1351 = vmatmul.mubr.bf16.gmra.mrb[0].mxu0 %v828
        %v1352 = vpop.f32.mrb[0].mxu0
        %v1353 = vadd.f32 0.0, %v1352
        %v1354 = vpop.f32.mrb[0].mxu0
        %v1355 = vpop.f32.mrb[0].mxu0
        %v1356 = vadd.f32 0.0, %v1355
        %v1357 = vpop.f32.mrb[0].mxu0
        %1358 = vmatprep.mubr.bf16.mxu0 %v831
        %1359 = vmatmul.mubr.bf16.gmra.mrb[0].mxu0 %v830
        %v1360 = vpop.f32.mrb[0].mxu0
        %v1361 = vadd.f32 0.0, %v1360
        %v1362 = vpop.f32.mrb[0].mxu0
        %v1363 = vpop.f32.mrb[0].mxu0
        %v1364 = vadd.f32 0.0, %v1363
        %v1365 = vpop.f32.mrb[0].mxu0
        %1366 = vmatprep.mubr.bf16.mxu0 %v833
        %1367 = vmatmul.mubr.bf16.gmra.mrb[0].mxu0 %v832
        %v1368 = vpop.f32.mrb[0].mxu0
        %v1369 = vadd.f32 0.0, %v1368
        %v1370 = vpop.f32.mrb[0].mxu0
        %v1371 = vpop.f32.mrb[0].mxu0
        %v1372 = vadd.f32 0.0, %v1371
        %v1373 = vpop.f32.mrb[0].mxu0
        %1374 = vmatprep.mubr.bf16.mxu0 %v835
        %1375 = vmatmul.mubr.bf16.gmra.mrb[0].mxu0 %v834
        %v1376 = vpop.f32.mrb[0].mxu0
        %v1377 = vadd.f32 0.0, %v1376
        %v1378 = vpop.f32.mrb[0].mxu0
        %v1379 = vpop.f32.mrb[0].mxu0
        %v1380 = vadd.f32 0.0, %v1379
        %v1381 = vpop.f32.mrb[0].mxu0
        %1382 = vmatprep.mubr.bf16.mxu0 %v837
        %1383 = vmatmul.mubr.bf16.gmra.mrb[0].mxu0 %v836
        %v1384 = vpop.f32.mrb[0].mxu0
        %v1385 = vadd.f32 0.0, %v1384
        %v1386 = vpop.f32.mrb[0].mxu0
        %v1387 = vpop.f32.mrb[0].mxu0
        %v1388 = vadd.f32 0.0, %v1387
        %v1389 = vpop.f32.mrb[0].mxu0
        %1390 = vmatprep.mubr.bf16.mxu0 %v839
        %1391 = vmatmul.mubr.bf16.gmra.mrb[0].mxu0 %v838
        %v1392 = vpop.f32.mrb[0].mxu0
        %v1393 = vadd.f32 0.0, %v1392
        %v1394 = vpop.f32.mrb[0].mxu0
        %v1395 = vpop.f32.mrb[0].mxu0
        %v1396 = vadd.f32 0.0, %v1395
        %v1397 = vpop.f32.mrb[0].mxu0
        %1398 = vmatprep.mubr.bf16.mxu0 %v841
        %1399 = vmatmul.mubr.bf16.gmra.mrb[0].mxu0 %v840
        %v1400 = vpop.f32.mrb[0].mxu0
        %v1401 = vadd.f32 0.0, %v1400
        %v1402 = vpop.f32.mrb[0].mxu0
        %v1403 = vpop.f32.mrb[0].mxu0
        %v1404 = vadd.f32 0.0, %v1403
        %v1405 = vpop.f32.mrb[0].mxu0
        %1406 = vmatprep.mubr.bf16.mxu0 %v843
        %1407 = vmatmul.mubr.bf16.gmra.mrb[0].mxu0 %v842
        %v1408 = vpop.f32.mrb[0].mxu0
        %v1409 = vadd.f32 0.0, %v1408
        %v1410 = vpop.f32.mrb[0].mxu0
        %v1411 = vpop.f32.mrb[0].mxu0
        %v1412 = vadd.f32 0.0, %v1411
        %v1413 = vpop.f32.mrb[0].mxu0
        %1414 = vmatprep.mubr.bf16.mxu0 %v845
        %1415 = vmatmul.mubr.bf16.gmra.mrb[0].mxu0 %v844
        %v1416 = vpop.f32.mrb[0].mxu0
        %v1417 = vadd.f32 0.0, %v1416
        %v1418 = vpop.f32.mrb[0].mxu0
        %v1419 = vpop.f32.mrb[0].mxu0
        %v1420 = vadd.f32 0.0, %v1419
        %v1421 = vpop.f32.mrb[0].mxu0
        %1422 = vmatprep.mubr.bf16.mxu0 %v847
        %1423 = vmatmul.mubr.bf16.gmra.mrb[0].mxu0 %v846
        %v1424 = vpop.f32.mrb[0].mxu0
        %v1425 = vadd.f32 0.0, %v1424
        %v1426 = vpop.f32.mrb[0].mxu0
        %v1427 = vpop.f32.mrb[0].mxu0
        %v1428 = vadd.f32 0.0, %v1427
        %v1429 = vpop.f32.mrb[0].mxu0
        %1430 = vmatprep.mubr.bf16.mxu0 %v849
        %1431 = vmatmul.mubr.bf16.gmra.mrb[0].mxu0 %v848
        %v1432 = vpop.f32.mrb[0].mxu0
        %v1433 = vadd.f32 0.0, %v1432
        %v1434 = vpop.f32.mrb[0].mxu0
        %v1435 = vpop.f32.mrb[0].mxu0
        %v1436 = vadd.f32 0.0, %v1435
        %v1437 = vpop.f32.mrb[0].mxu0
        %1438 = vmatprep.mubr.bf16.mxu0 %v851
        %1439 = vmatmul.mubr.bf16.gmra.mrb[0].mxu0 %v850
        %v1440 = vpop.f32.mrb[0].mxu0
        %v1441 = vadd.f32 0.0, %v1440
        %v1442 = vpop.f32.mrb[0].mxu0
        %v1443 = vpop.f32.mrb[0].mxu0
        %v1444 = vadd.f32 0.0, %v1443
        %v1445 = vpop.f32.mrb[0].mxu0
        %1446 = vmatprep.mubr.bf16.mxu0 %v853
        %1447 = vmatmul.mubr.bf16.gmra.mrb[0].mxu0 %v852
        %v1448 = vpop.f32.mrb[0].mxu0
        %v1449 = vadd.f32 0.0, %v1448
        %v1450 = vpop.f32.mrb[0].mxu0
        %v1451 = vpop.f32.mrb[0].mxu0
        %v1452 = vadd.f32 0.0, %v1451
        %v1453 = vpop.f32.mrb[0].mxu0
        %1454 = vmatprep.mubr.bf16.mxu0 %v855
        %1455 = vmatmul.mubr.bf16.gmra.mrb[0].mxu0 %v854
        %v1456 = vpop.f32.mrb[0].mxu0
        %v1457 = vadd.f32 0.0, %v1456
        %v1458 = vpop.f32.mrb[0].mxu0
        %v1459 = vpop.f32.mrb[0].mxu0
        %v1460 = vadd.f32 0.0, %v1459
        %v1461 = vpop.f32.mrb[0].mxu0
        %1462 = vmatprep.mubr.bf16.mxu0 %v857
        %1463 = vmatmul.mubr.bf16.gmra.mrb[0].mxu0 %v856
        %v1464 = vpop.f32.mrb[0].mxu0
        %v1465 = vadd.f32 0.0, %v1464
        %v1466 = vpop.f32.mrb[0].mxu0
        %v1467 = vpop.f32.mrb[0].mxu0
        %v1468 = vadd.f32 0.0, %v1467
        %v1469 = vpop.f32.mrb[0].mxu0
        %1470 = vmatprep.mubr.bf16.mxu0 %v859
        %1471 = vmatmul.mubr.bf16.gmra.mrb[0].mxu0 %v858
        %v1472 = vpop.f32.mrb[0].mxu0
        %v1473 = vadd.f32 0.0, %v1472
        %v1474 = vpop.f32.mrb[0].mxu0
        %v1475 = vpop.f32.mrb[0].mxu0
        %v1476 = vadd.f32 0.0, %v1475
        %v1477 = vpop.f32.mrb[0].mxu0
        %1478 = vmatprep.mubr.bf16.mxu0 %v861
        %1479 = vmatmul.mubr.bf16.gmra.mrb[0].mxu0 %v860
        %v1480 = vpop.f32.mrb[0].mxu0
        %v1481 = vadd.f32 0.0, %v1480
        %v1482 = vpop.f32.mrb[0].mxu0
        %v1483 = vpop.f32.mrb[0].mxu0
        %v1484 = vadd.f32 0.0, %v1483
        %v1485 = vpop.f32.mrb[0].mxu0
        %1486 = vmatprep.mubr.bf16.mxu0 %v863
        %1487 = vmatmul.mubr.bf16.gmra.mrb[0].mxu0 %v862
        %v1488 = vpop.f32.mrb[0].mxu0
        %v1489 = vadd.f32 0.0, %v1488
        %v1490 = vpop.f32.mrb[0].mxu0
        %v1491 = vpop.f32.mrb[0].mxu0
        %v1492 = vadd.f32 0.0, %v1491
        %v1493 = vpop.f32.mrb[0].mxu0
        %1494 = vmatprep.mubr.bf16.mxu0 %v865
        %1495 = vmatmul.mubr.bf16.gmra.mrb[0].mxu0 %v864
        %v1496 = vpop.f32.mrb[0].mxu0
        %v1497 = vadd.f32 0.0, %v1496
        %v1498 = vpop.f32.mrb[0].mxu0
        %v1499 = vpop.f32.mrb[0].mxu0
        %v1500 = vadd.f32 0.0, %v1499
        %v1501 = vpop.f32.mrb[0].mxu0
        %1502 = vmatprep.mubr.bf16.mxu0 %v867
        %1503 = vmatmul.mubr.bf16.gmra.mrb[0].mxu0 %v866
        %v1504 = vpop.f32.mrb[0].mxu0
        %v1505 = vadd.f32 0.0, %v1504
        %v1506 = vpop.f32.mrb[0].mxu0
        %v1507 = vpop.f32.mrb[0].mxu0
        %v1508 = vadd.f32 0.0, %v1507
        %v1509 = vpop.f32.mrb[0].mxu0
        %1510 = vmatprep.mubr.bf16.mxu0 %v869
        %1511 = vmatmul.mubr.bf16.gmra.mrb[0].mxu0 %v868
        %v1512 = vpop.f32.mrb[0].mxu0
        %v1513 = vadd.f32 0.0, %v1512
        %v1514 = vpop.f32.mrb[0].mxu0
        %v1515 = vpop.f32.mrb[0].mxu0
        %v1516 = vadd.f32 0.0, %v1515
        %v1517 = vpop.f32.mrb[0].mxu0
        %1518 = vmatprep.mubr.bf16.mxu0 %v871
        %1519 = vmatmul.mubr.bf16.gmra.mrb[0].mxu0 %v870
        %v1520 = vpop.f32.mrb[0].mxu0
        %v1521 = vadd.f32 0.0, %v1520
        %v1522 = vpop.f32.mrb[0].mxu0
        %v1523 = vpop.f32.mrb[0].mxu0
        %v1524 = vadd.f32 0.0, %v1523
        %v1525 = vpop.f32.mrb[0].mxu0
        %1526 = vmatprep.mubr.bf16.mxu0 %v873
        %1527 = vmatmul.mubr.bf16.gmra.mrb[0].mxu0 %v872
        %v1528 = vpop.f32.mrb[0].mxu0
        %v1529 = vadd.f32 0.0, %v1528
        %v1530 = vpop.f32.mrb[0].mxu0
        %v1531 = vpop.f32.mrb[0].mxu0
        %v1532 = vadd.f32 0.0, %v1531
        %v1533 = vpop.f32.mrb[0].mxu0
        %1534 = vmatprep.mubr.bf16.mxu0 %v875
        %1535 = vmatmul.mubr.bf16.gmra.mrb[0].mxu0 %v874
        %v1536 = vpop.f32.mrb[0].mxu0
        %v1537 = vadd.f32 0.0, %v1536
        %v1538 = vpop.f32.mrb[0].mxu0
        %v1539 = vpop.f32.mrb[0].mxu0
        %v1540 = vadd.f32 0.0, %v1539
        %v1541 = vpop.f32.mrb[0].mxu0
        %1542 = vmatprep.mubr.bf16.mxu0 %v877
        %1543 = vmatmul.mubr.bf16.gmra.mrb[0].mxu0 %v876
        %v1544 = vpop.f32.mrb[0].mxu0
        %v1545 = vadd.f32 0.0, %v1544
        %v1546 = vpop.f32.mrb[0].mxu0
        %v1547 = vpop.f32.mrb[0].mxu0
        %v1548 = vadd.f32 0.0, %v1547
        %v1549 = vpop.f32.mrb[0].mxu0
        %1550 = vmatprep.mubr.bf16.mxu0 %v879
        %1551 = vmatmul.mubr.bf16.gmra.mrb[0].mxu0 %v878
        %v1552 = vpop.f32.mrb[0].mxu0
        %v1553 = vadd.f32 0.0, %v1552
        %v1554 = vpop.f32.mrb[0].mxu0
        %v1555 = vpop.f32.mrb[0].mxu0
        %v1556 = vadd.f32 0.0, %v1555
        %v1557 = vpop.f32.mrb[0].mxu0
        %1558 = vmatprep.mubr.bf16.mxu0 %v881
        %1559 = vmatmul.mubr.bf16.gmra.mrb[0].mxu0 %v880
        %v1560 = vpop.f32.mrb[0].mxu0
        %v1561 = vadd.f32 0.0, %v1560
        %v1562 = vpop.f32.mrb[0].mxu0
        %v1563 = vpop.f32.mrb[0].mxu0
        %v1564 = vadd.f32 0.0, %v1563
        %v1565 = vpop.f32.mrb[0].mxu0
        %1566 = vmatprep.mubr.bf16.mxu0 %v883
        %1567 = vmatmul.mubr.bf16.gmra.mrb[0].mxu0 %v882
        %v1568 = vpop.f32.mrb[0].mxu0
        %v1569 = vadd.f32 0.0, %v1568
        %v1570 = vpop.f32.mrb[0].mxu0
        %v1571 = vpop.f32.mrb[0].mxu0
        %v1572 = vadd.f32 0.0, %v1571
        %v1573 = vpop.f32.mrb[0].mxu0
        %1574 = vmatprep.mubr.bf16.mxu0 %v885
        %1575 = vmatmul.mubr.bf16.gmra.mrb[0].mxu0 %v884
        %v1576 = vpop.f32.mrb[0].mxu0
        %v1577 = vadd.f32 0.0, %v1576
        %v1578 = vpop.f32.mrb[0].mxu0
        %v1579 = vpop.f32.mrb[0].mxu0
        %v1580 = vadd.f32 0.0, %v1579
        %v1581 = vpop.f32.mrb[0].mxu0
        %1582 = vmatprep.mubr.bf16.mxu0 %v887
        %1583 = vmatmul.mubr.bf16.gmra.mrb[0].mxu0 %v886
        %v1584 = vpop.f32.mrb[0].mxu0
        %v1585 = vadd.f32 0.0, %v1584
        %v1586 = vpop.f32.mrb[0].mxu0
        %v1587 = vpop.f32.mrb[0].mxu0
        %v1588 = vadd.f32 0.0, %v1587
        %v1589 = vpop.f32.mrb[0].mxu0
        %1590 = vmatprep.mubr.bf16.mxu0 %v889
        %1591 = vmatmul.mubr.bf16.gmra.mrb[0].mxu0 %v888
        %v1592 = vpop.f32.mrb[0].mxu0
        %v1593 = vadd.f32 0.0, %v1592
        %v1594 = vpop.f32.mrb[0].mxu0
        %v1595 = vpop.f32.mrb[0].mxu0
        %v1596 = vadd.f32 0.0, %v1595
        %v1597 = vpop.f32.mrb[0].mxu0
        %1598 = vmatprep.mubr.bf16.mxu0 %v891
        %1599 = vmatmul.mubr.bf16.gmra.mrb[0].mxu0 %v890
        %v1600 = vpop.f32.mrb[0].mxu0
        %v1601 = vadd.f32 0.0, %v1600
        %v1602 = vpop.f32.mrb[0].mxu0
        %v1603 = vpop.f32.mrb[0].mxu0
        %v1604 = vadd.f32 0.0, %v1603
        %v1605 = vpop.f32.mrb[0].mxu0
        %1606 = vmatprep.mubr.bf16.mxu0 %v893
        %1607 = vmatmul.mubr.bf16.gmra.mrb[0].mxu0 %v892
        %v1608 = vpop.f32.mrb[0].mxu0
        %v1609 = vadd.f32 0.0, %v1608
        %v1610 = vpop.f32.mrb[0].mxu0
        %v1611 = vpop.f32.mrb[0].mxu0
        %v1612 = vadd.f32 0.0, %v1611
        %v1613 = vpop.f32.mrb[0].mxu0
        %1614 = vmatprep.mubr.bf16.mxu0 %v895
        %1615 = vmatmul.mubr.bf16.gmra.mrb[0].mxu0 %v894
        %v1616 = vpop.f32.mrb[0].mxu0
        %v1617 = vadd.f32 0.0, %v1616
        %v1618 = vpop.f32.mrb[0].mxu0
        %v1619 = vpop.f32.mrb[0].mxu0
        %v1620 = vadd.f32 0.0, %v1619
        %v1621 = vpop.f32.mrb[0].mxu0
        %1622 = vmatprep.mubr.bf16.mxu0 %v897
        %1623 = vmatmul.mubr.bf16.gmra.mrb[0].mxu0 %v896
        %v1624 = vpop.f32.mrb[0].mxu0
        %v1625 = vadd.f32 0.0, %v1624
        %v1626 = vpop.f32.mrb[0].mxu0
        %v1627 = vpop.f32.mrb[0].mxu0
        %v1628 = vadd.f32 0.0, %v1627
        %v1629 = vpop.f32.mrb[0].mxu0
        %1630 = vmatprep.mubr.bf16.mxu0 %v899
        %1631 = vmatmul.mubr.bf16.gmra.mrb[0].mxu0 %v898
        %v1632 = vpop.f32.mrb[0].mxu0
        %v1633 = vadd.f32 0.0, %v1632
        %v1634 = vpop.f32.mrb[0].mxu0
        %v1635 = vpop.f32.mrb[0].mxu0
        %v1636 = vadd.f32 0.0, %v1635
        %v1637 = vpop.f32.mrb[0].mxu0
        %1638 = vmatprep.mubr.bf16.mxu0 %v901
        %1639 = vmatmul.mubr.bf16.gmra.mrb[0].mxu0 %v900
        %v1640 = vpop.f32.mrb[0].mxu0
        %v1641 = vadd.f32 0.0, %v1640
        %v1642 = vpop.f32.mrb[0].mxu0
        %v1643 = vpop.f32.mrb[0].mxu0
        %v1644 = vadd.f32 0.0, %v1643
        %v1645 = vpop.f32.mrb[0].mxu0
        %1646 = vmatprep.mubr.bf16.mxu0 %v903
        %1647 = vmatmul.mubr.bf16.gmra.mrb[0].mxu0 %v902
        %v1648 = vpop.f32.mrb[0].mxu0
        %v1649 = vadd.f32 0.0, %v1648
        %v1650 = vpop.f32.mrb[0].mxu0
        %v1651 = vpop.f32.mrb[0].mxu0
        %v1652 = vadd.f32 0.0, %v1651
        %v1653 = vpop.f32.mrb[0].mxu0
        %1654 = vmatprep.mubr.bf16.mxu0 %v905
        %1655 = vmatmul.mubr.bf16.gmra.mrb[0].mxu0 %v904
        %v1656 = vpop.f32.mrb[0].mxu0
        %v1657 = vadd.f32 0.0, %v1656
        %v1658 = vpop.f32.mrb[0].mxu0
        %v1659 = vpop.f32.mrb[0].mxu0
        %v1660 = vadd.f32 0.0, %v1659
        %v1661 = vpop.f32.mrb[0].mxu0
        %1662 = vmatprep.mubr.bf16.mxu0 %v907
        %1663 = vmatmul.mubr.bf16.gmra.mrb[0].mxu0 %v906
        %v1664 = vpop.f32.mrb[0].mxu0
        %v1665 = vadd.f32 0.0, %v1664
        %v1666 = vpop.f32.mrb[0].mxu0
        %v1667 = vpop.f32.mrb[0].mxu0
        %v1668 = vadd.f32 0.0, %v1667
        %v1669 = vpop.f32.mrb[0].mxu0
        %1670 = vmatprep.mubr.bf16.mxu0 %v909
        %1671 = vmatmul.mubr.bf16.gmra.mrb[0].mxu0 %v908
        %v1672 = vpop.f32.mrb[0].mxu0
        %v1673 = vadd.f32 0.0, %v1672
        %v1674 = vpop.f32.mrb[0].mxu0
        %v1675 = vpop.f32.mrb[0].mxu0
        %v1676 = vadd.f32 0.0, %v1675
        %v1677 = vpop.f32.mrb[0].mxu0
        %1678 = vdwg.mxu0
        %v1679 = vld [vmem:[%s2] sm:$0x1]
        %v1681 = vlaneseq
        %v1682 = vshrl.u32 %v1681, 7
        %v1683 = vsub.s32 0, %v1682
        %v1684 = vrot.slane %v1679, %v1683
        %v1686 = vmul.f32 %v1169, %v1684
        %v1687 = vmul.f32 %v1172, %v1684
        %v1688 = vmul.f32 %v1177, %v1684
        %v1689 = vmul.f32 %v1180, %v1684
        %v1690 = vmul.f32 %v1185, %v1684
        %v1691 = vmul.f32 %v1188, %v1684
        %v1692 = vmul.f32 %v1193, %v1684
        %v1693 = vmul.f32 %v1196, %v1684
        %v1694 = vmul.f32 %v1201, %v1684
        %v1695 = vmul.f32 %v1204, %v1684
        %v1696 = vmul.f32 %v1209, %v1684
        %v1697 = vmul.f32 %v1212, %v1684
        %v1698 = vmul.f32 %v1217, %v1684
        %v1699 = vmul.f32 %v1220, %v1684
        %v1700 = vmul.f32 %v1225, %v1684
        %v1701 = vmul.f32 %v1228, %v1684
        %v1702 = vmul.f32 %v1233, %v1684
        %v1703 = vmul.f32 %v1236, %v1684
        %v1704 = vmul.f32 %v1241, %v1684
        %v1705 = vmul.f32 %v1244, %v1684
        %v1706 = vmul.f32 %v1249, %v1684
        %v1707 = vmul.f32 %v1252, %v1684
        %v1708 = vmul.f32 %v1257, %v1684
        %v1709 = vmul.f32 %v1260, %v1684
        %v1710 = vmul.f32 %v1265, %v1684
        %v1711 = vmul.f32 %v1268, %v1684
        %v1712 = vmul.f32 %v1273, %v1684
        %v1713 = vmul.f32 %v1276, %v1684
        %v1714 = vmul.f32 %v1281, %v1684
        %v1715 = vmul.f32 %v1284, %v1684
        %v1716 = vmul.f32 %v1289, %v1684
        %v1717 = vmul.f32 %v1292, %v1684
        %v1718 = vmul.f32 %v1297, %v1684
        %v1719 = vmul.f32 %v1300, %v1684
        %v1720 = vmul.f32 %v1305, %v1684
        %v1721 = vmul.f32 %v1308, %v1684
        %v1722 = vmul.f32 %v1313, %v1684
        %v1723 = vmul.f32 %v1316, %v1684
        %v1724 = vmul.f32 %v1321, %v1684
        %v1725 = vmul.f32 %v1324, %v1684
        %v1726 = vmul.f32 %v1329, %v1684
        %v1727 = vmul.f32 %v1332, %v1684
        %v1728 = vmul.f32 %v1337, %v1684
        %v1729 = vmul.f32 %v1340, %v1684
        %v1730 = vmul.f32 %v1345, %v1684
        %v1731 = vmul.f32 %v1348, %v1684
        %v1732 = vmul.f32 %v1353, %v1684
        %v1733 = vmul.f32 %v1356, %v1684
        %v1734 = vmul.f32 %v1361, %v1684
        %v1735 = vmul.f32 %v1364, %v1684
        %v1736 = vmul.f32 %v1369, %v1684
        %v1737 = vmul.f32 %v1372, %v1684
        %v1738 = vmul.f32 %v1377, %v1684
        %v1739 = vmul.f32 %v1380, %v1684
        %v1740 = vmul.f32 %v1385, %v1684
        %v1741 = vmul.f32 %v1388, %v1684
        %v1742 = vmul.f32 %v1393, %v1684
        %v1743 = vmul.f32 %v1396, %v1684
        %v1744 = vmul.f32 %v1401, %v1684
        %v1745 = vmul.f32 %v1404, %v1684
        %v1746 = vmul.f32 %v1409, %v1684
        %v1747 = vmul.f32 %v1412, %v1684
        %v1748 = vmul.f32 %v1417, %v1684
        %v1749 = vmul.f32 %v1420, %v1684
        %v1750 = vmul.f32 %v1425, %v1684
        %v1751 = vmul.f32 %v1428, %v1684
        %v1752 = vmul.f32 %v1433, %v1684
        %v1753 = vmul.f32 %v1436, %v1684
        %v1754 = vmul.f32 %v1441, %v1684
        %v1755 = vmul.f32 %v1444, %v1684
        %v1756 = vmul.f32 %v1449, %v1684
        %v1757 = vmul.f32 %v1452, %v1684
        %v1758 = vmul.f32 %v1457, %v1684
        %v1759 = vmul.f32 %v1460, %v1684
        %v1760 = vmul.f32 %v1465, %v1684
        %v1761 = vmul.f32 %v1468, %v1684
        %v1762 = vmul.f32 %v1473, %v1684
        %v1763 = vmul.f32 %v1476, %v1684
        %v1764 = vmul.f32 %v1481, %v1684
        %v1765 = vmul.f32 %v1484, %v1684
        %v1766 = vmul.f32 %v1489, %v1684
        %v1767 = vmul.f32 %v1492, %v1684
        %v1768 = vmul.f32 %v1497, %v1684
        %v1769 = vmul.f32 %v1500, %v1684
        %v1770 = vmul.f32 %v1505, %v1684
        %v1771 = vmul.f32 %v1508, %v1684
        %v1772 = vmul.f32 %v1513, %v1684
        %v1773 = vmul.f32 %v1516, %v1684
        %v1774 = vmul.f32 %v1521, %v1684
        %v1775 = vmul.f32 %v1524, %v1684
        %v1776 = vmul.f32 %v1529, %v1684
        %v1777 = vmul.f32 %v1532, %v1684
        %v1778 = vmul.f32 %v1537, %v1684
        %v1779 = vmul.f32 %v1540, %v1684
        %v1780 = vmul.f32 %v1545, %v1684
        %v1781 = vmul.f32 %v1548, %v1684
        %v1782 = vmul.f32 %v1553, %v1684
        %v1783 = vmul.f32 %v1556, %v1684
        %v1784 = vmul.f32 %v1561, %v1684
        %v1785 = vmul.f32 %v1564, %v1684
        %v1786 = vmul.f32 %v1569, %v1684
        %v1787 = vmul.f32 %v1572, %v1684
        %v1788 = vmul.f32 %v1577, %v1684
        %v1789 = vmul.f32 %v1580, %v1684
        %v1790 = vmul.f32 %v1585, %v1684
        %v1791 = vmul.f32 %v1588, %v1684
        %v1792 = vmul.f32 %v1593, %v1684
        %v1793 = vmul.f32 %v1596, %v1684
        %v1794 = vmul.f32 %v1601, %v1684
        %v1795 = vmul.f32 %v1604, %v1684
        %v1796 = vmul.f32 %v1609, %v1684
        %v1797 = vmul.f32 %v1612, %v1684
        %v1798 = vmul.f32 %v1617, %v1684
        %v1799 = vmul.f32 %v1620, %v1684
        %v1800 = vmul.f32 %v1625, %v1684
        %v1801 = vmul.f32 %v1628, %v1684
        %v1802 = vmul.f32 %v1633, %v1684
        %v1803 = vmul.f32 %v1636, %v1684
        %v1804 = vmul.f32 %v1641, %v1684
        %v1805 = vmul.f32 %v1644, %v1684
        %v1806 = vmul.f32 %v1649, %v1684
        %v1807 = vmul.f32 %v1652, %v1684
        %v1808 = vmul.f32 %v1657, %v1684
        %v1809 = vmul.f32 %v1660, %v1684
        %v1810 = vmul.f32 %v1665, %v1684
        %v1811 = vmul.f32 %v1668, %v1684
        %v1812 = vmul.f32 %v1673, %v1684
        %v1813 = vmul.f32 %v1676, %v1684
        %v1814 = vld [vmem:[%s3] sm:$0x1]
        %v1816 = vlaneseq
        %v1817 = vshrl.u32 %v1816, 7
        %v1818 = vsub.s32 0, %v1817
        %v1819 = vrot.slane %v1814, %v1818
        %v1821 = vadd.f32 %v1686, %v1819
        %v1822 = vadd.f32 %v1687, %v1819
        %v1823 = vadd.f32 %v1688, %v1819
        %v1824 = vadd.f32 %v1689, %v1819
        %v1825 = vadd.f32 %v1690, %v1819
        %v1826 = vadd.f32 %v1691, %v1819
        %v1827 = vadd.f32 %v1692, %v1819
        %v1828 = vadd.f32 %v1693, %v1819
        %v1829 = vadd.f32 %v1694, %v1819
        %v1830 = vadd.f32 %v1695, %v1819
        %v1831 = vadd.f32 %v1696, %v1819
        %v1832 = vadd.f32 %v1697, %v1819
        %v1833 = vadd.f32 %v1698, %v1819
        %v1834 = vadd.f32 %v1699, %v1819
        %v1835 = vadd.f32 %v1700, %v1819
        %v1836 = vadd.f32 %v1701, %v1819
        %v1837 = vadd.f32 %v1702, %v1819
        %v1838 = vadd.f32 %v1703, %v1819
        %v1839 = vadd.f32 %v1704, %v1819
        %v1840 = vadd.f32 %v1705, %v1819
        %v1841 = vadd.f32 %v1706, %v1819
        %v1842 = vadd.f32 %v1707, %v1819
        %v1843 = vadd.f32 %v1708, %v1819
        %v1844 = vadd.f32 %v1709, %v1819
        %v1845 = vadd.f32 %v1710, %v1819
        %v1846 = vadd.f32 %v1711, %v1819
        %v1847 = vadd.f32 %v1712, %v1819
        %v1848 = vadd.f32 %v1713, %v1819
        %v1849 = vadd.f32 %v1714, %v1819
        %v1850 = vadd.f32 %v1715, %v1819
        %v1851 = vadd.f32 %v1716, %v1819
        %v1852 = vadd.f32 %v1717, %v1819
        %v1853 = vadd.f32 %v1718, %v1819
        %v1854 = vadd.f32 %v1719, %v1819
        %v1855 = vadd.f32 %v1720, %v1819
        %v1856 = vadd.f32 %v1721, %v1819
        %v1857 = vadd.f32 %v1722, %v1819
        %v1858 = vadd.f32 %v1723, %v1819
        %v1859 = vadd.f32 %v1724, %v1819
        %v1860 = vadd.f32 %v1725, %v1819
        %v1861 = vadd.f32 %v1726, %v1819
        %v1862 = vadd.f32 %v1727, %v1819
        %v1863 = vadd.f32 %v1728, %v1819
        %v1864 = vadd.f32 %v1729, %v1819
        %v1865 = vadd.f32 %v1730, %v1819
        %v1866 = vadd.f32 %v1731, %v1819
        %v1867 = vadd.f32 %v1732, %v1819
        %v1868 = vadd.f32 %v1733, %v1819
        %v1869 = vadd.f32 %v1734, %v1819
        %v1870 = vadd.f32 %v1735, %v1819
        %v1871 = vadd.f32 %v1736, %v1819
        %v1872 = vadd.f32 %v1737, %v1819
        %v1873 = vadd.f32 %v1738, %v1819
        %v1874 = vadd.f32 %v1739, %v1819
        %v1875 = vadd.f32 %v1740, %v1819
        %v1876 = vadd.f32 %v1741, %v1819
        %v1877 = vadd.f32 %v1742, %v1819
        %v1878 = vadd.f32 %v1743, %v1819
        %v1879 = vadd.f32 %v1744, %v1819
        %v1880 = vadd.f32 %v1745, %v1819
        %v1881 = vadd.f32 %v1746, %v1819
        %v1882 = vadd.f32 %v1747, %v1819
        %v1883 = vadd.f32 %v1748, %v1819
        %v1884 = vadd.f32 %v1749, %v1819
        %v1885 = vadd.f32 %v1750, %v1819
        %v1886 = vadd.f32 %v1751, %v1819
        %v1887 = vadd.f32 %v1752, %v1819
        %v1888 = vadd.f32 %v1753, %v1819
        %v1889 = vadd.f32 %v1754, %v1819
        %v1890 = vadd.f32 %v1755, %v1819
        %v1891 = vadd.f32 %v1756, %v1819
        %v1892 = vadd.f32 %v1757, %v1819
        %v1893 = vadd.f32 %v1758, %v1819
        %v1894 = vadd.f32 %v1759, %v1819
        %v1895 = vadd.f32 %v1760, %v1819
        %v1896 = vadd.f32 %v1761, %v1819
        %v1897 = vadd.f32 %v1762, %v1819
        %v1898 = vadd.f32 %v1763, %v1819
        %v1899 = vadd.f32 %v1764, %v1819
        %v1900 = vadd.f32 %v1765, %v1819
        %v1901 = vadd.f32 %v1766, %v1819
        %v1902 = vadd.f32 %v1767, %v1819
        %v1903 = vadd.f32 %v1768, %v1819
        %v1904 = vadd.f32 %v1769, %v1819
        %v1905 = vadd.f32 %v1770, %v1819
        %v1906 = vadd.f32 %v1771, %v1819
        %v1907 = vadd.f32 %v1772, %v1819
        %v1908 = vadd.f32 %v1773, %v1819
        %v1909 = vadd.f32 %v1774, %v1819
        %v1910 = vadd.f32 %v1775, %v1819
        %v1911 = vadd.f32 %v1776, %v1819
        %v1912 = vadd.f32 %v1777, %v1819
        %v1913 = vadd.f32 %v1778, %v1819
        %v1914 = vadd.f32 %v1779, %v1819
        %v1915 = vadd.f32 %v1780, %v1819
        %v1916 = vadd.f32 %v1781, %v1819
        %v1917 = vadd.f32 %v1782, %v1819
        %v1918 = vadd.f32 %v1783, %v1819
        %v1919 = vadd.f32 %v1784, %v1819
        %v1920 = vadd.f32 %v1785, %v1819
        %v1921 = vadd.f32 %v1786, %v1819
        %v1922 = vadd.f32 %v1787, %v1819
        %v1923 = vadd.f32 %v1788, %v1819
        %v1924 = vadd.f32 %v1789, %v1819
        %v1925 = vadd.f32 %v1790, %v1819
        %v1926 = vadd.f32 %v1791, %v1819
        %v1927 = vadd.f32 %v1792, %v1819
        %v1928 = vadd.f32 %v1793, %v1819
        %v1929 = vadd.f32 %v1794, %v1819
        %v1930 = vadd.f32 %v1795, %v1819
        %v1931 = vadd.f32 %v1796, %v1819
        %v1932 = vadd.f32 %v1797, %v1819
        %v1933 = vadd.f32 %v1798, %v1819
        %v1934 = vadd.f32 %v1799, %v1819
        %v1935 = vadd.f32 %v1800, %v1819
        %v1936 = vadd.f32 %v1801, %v1819
        %v1937 = vadd.f32 %v1802, %v1819
        %v1938 = vadd.f32 %v1803, %v1819
        %v1939 = vadd.f32 %v1804, %v1819
        %v1940 = vadd.f32 %v1805, %v1819
        %v1941 = vadd.f32 %v1806, %v1819
        %v1942 = vadd.f32 %v1807, %v1819
        %v1943 = vadd.f32 %v1808, %v1819
        %v1944 = vadd.f32 %v1809, %v1819
        %v1945 = vadd.f32 %v1810, %v1819
        %v1946 = vadd.f32 %v1811, %v1819
        %v1947 = vadd.f32 %v1812, %v1819
        %v1948 = vadd.f32 %v1813, %v1819
        %v1949 = vmul.f32 %v1821, 0.1
        %v1950 = vmul.f32 %v1822, 0.1
        %v1951 = vmul.f32 %v1823, 0.1
        %v1952 = vmul.f32 %v1824, 0.1
        %v1953 = vmul.f32 %v1825, 0.1
        %v1954 = vmul.f32 %v1826, 0.1
        %v1955 = vmul.f32 %v1827, 0.1
        %v1956 = vmul.f32 %v1828, 0.1
        %v1957 = vmul.f32 %v1829, 0.1
        %v1958 = vmul.f32 %v1830, 0.1
        %v1959 = vmul.f32 %v1831, 0.1
        %v1960 = vmul.f32 %v1832, 0.1
        %v1961 = vmul.f32 %v1833, 0.1
        %v1962 = vmul.f32 %v1834, 0.1
        %v1963 = vmul.f32 %v1835, 0.1
        %v1964 = vmul.f32 %v1836, 0.1
        %v1965 = vmul.f32 %v1837, 0.1
        %v1966 = vmul.f32 %v1838, 0.1
        %v1967 = vmul.f32 %v1839, 0.1
        %v1968 = vmul.f32 %v1840, 0.1
        %v1969 = vmul.f32 %v1841, 0.1
        %v1970 = vmul.f32 %v1842, 0.1
        %v1971 = vmul.f32 %v1843, 0.1
        %v1972 = vmul.f32 %v1844, 0.1
        %v1973 = vmul.f32 %v1845, 0.1
        %v1974 = vmul.f32 %v1846, 0.1
        %v1975 = vmul.f32 %v1847, 0.1
        %v1976 = vmul.f32 %v1848, 0.1
        %v1977 = vmul.f32 %v1849, 0.1
        %v1978 = vmul.f32 %v1850, 0.1
        %v1979 = vmul.f32 %v1851, 0.1
        %v1980 = vmul.f32 %v1852, 0.1
        %v1981 = vmul.f32 %v1853, 0.1
        %v1982 = vmul.f32 %v1854, 0.1
        %v1983 = vmul.f32 %v1855, 0.1
        %v1984 = vmul.f32 %v1856, 0.1
        %v1985 = vmul.f32 %v1857, 0.1
        %v1986 = vmul.f32 %v1858, 0.1
        %v1987 = vmul.f32 %v1859, 0.1
        %v1988 = vmul.f32 %v1860, 0.1
        %v1989 = vmul.f32 %v1861, 0.1
        %v1990 = vmul.f32 %v1862, 0.1
        %v1991 = vmul.f32 %v1863, 0.1
        %v1992 = vmul.f32 %v1864, 0.1
        %v1993 = vmul.f32 %v1865, 0.1
        %v1994 = vmul.f32 %v1866, 0.1
        %v1995 = vmul.f32 %v1867, 0.1
        %v1996 = vmul.f32 %v1868, 0.1
        %v1997 = vmul.f32 %v1869, 0.1
        %v1998 = vmul.f32 %v1870, 0.1
        %v1999 = vmul.f32 %v1871, 0.1
        %v2000 = vmul.f32 %v1872, 0.1
        %v2001 = vmul.f32 %v1873, 0.1
        %v2002 = vmul.f32 %v1874, 0.1
        %v2003 = vmul.f32 %v1875, 0.1
        %v2004 = vmul.f32 %v1876, 0.1
        %v2005 = vmul.f32 %v1877, 0.1
        %v2006 = vmul.f32 %v1878, 0.1
        %v2007 = vmul.f32 %v1879, 0.1
        %v2008 = vmul.f32 %v1880, 0.1
        %v2009 = vmul.f32 %v1881, 0.1
        %v2010 = vmul.f32 %v1882, 0.1
        %v2011 = vmul.f32 %v1883, 0.1
        %v2012 = vmul.f32 %v1884, 0.1
        %v2013 = vmul.f32 %v1885, 0.1
        %v2014 = vmul.f32 %v1886, 0.1
        %v2015 = vmul.f32 %v1887, 0.1
        %v2016 = vmul.f32 %v1888, 0.1
        %v2017 = vmul.f32 %v1889, 0.1
        %v2018 = vmul.f32 %v1890, 0.1
        %v2019 = vmul.f32 %v1891, 0.1
        %v2020 = vmul.f32 %v1892, 0.1
        %v2021 = vmul.f32 %v1893, 0.1
        %v2022 = vmul.f32 %v1894, 0.1
        %v2023 = vmul.f32 %v1895, 0.1
        %v2024 = vmul.f32 %v1896, 0.1
        %v2025 = vmul.f32 %v1897, 0.1
        %v2026 = vmul.f32 %v1898, 0.1
        %v2027 = vmul.f32 %v1899, 0.1
        %v2028 = vmul.f32 %v1900, 0.1
        %v2029 = vmul.f32 %v1901, 0.1
        %v2030 = vmul.f32 %v1902, 0.1
        %v2031 = vmul.f32 %v1903, 0.1
        %v2032 = vmul.f32 %v1904, 0.1
        %v2033 = vmul.f32 %v1905, 0.1
        %v2034 = vmul.f32 %v1906, 0.1
        %v2035 = vmul.f32 %v1907, 0.1
        %v2036 = vmul.f32 %v1908, 0.1
        %v2037 = vmul.f32 %v1909, 0.1
        %v2038 = vmul.f32 %v1910, 0.1
        %v2039 = vmul.f32 %v1911, 0.1
        %v2040 = vmul.f32 %v1912, 0.1
        %v2041 = vmul.f32 %v1913, 0.1
        %v2042 = vmul.f32 %v1914, 0.1
        %v2043 = vmul.f32 %v1915, 0.1
        %v2044 = vmul.f32 %v1916, 0.1
        %v2045 = vmul.f32 %v1917, 0.1
        %v2046 = vmul.f32 %v1918, 0.1
        %v2047 = vmul.f32 %v1919, 0.1
        %v2048 = vmul.f32 %v1920, 0.1
        %v2049 = vmul.f32 %v1921, 0.1
        %v2050 = vmul.f32 %v1922, 0.1
        %v2051 = vmul.f32 %v1923, 0.1
        %v2052 = vmul.f32 %v1924, 0.1
        %v2053 = vmul.f32 %v1925, 0.1
        %v2054 = vmul.f32 %v1926, 0.1
        %v2055 = vmul.f32 %v1927, 0.1
        %v2056 = vmul.f32 %v1928, 0.1
        %v2057 = vmul.f32 %v1929, 0.1
        %v2058 = vmul.f32 %v1930, 0.1
        %v2059 = vmul.f32 %v1931, 0.1
        %v2060 = vmul.f32 %v1932, 0.1
        %v2061 = vmul.f32 %v1933, 0.1
        %v2062 = vmul.f32 %v1934, 0.1
        %v2063 = vmul.f32 %v1935, 0.1
        %v2064 = vmul.f32 %v1936, 0.1
        %v2065 = vmul.f32 %v1937, 0.1
        %v2066 = vmul.f32 %v1938, 0.1
        %v2067 = vmul.f32 %v1939, 0.1
        %v2068 = vmul.f32 %v1940, 0.1
        %v2069 = vmul.f32 %v1941, 0.1
        %v2070 = vmul.f32 %v1942, 0.1
        %v2071 = vmul.f32 %v1943, 0.1
        %v2072 = vmul.f32 %v1944, 0.1
        %v2073 = vmul.f32 %v1945, 0.1
        %v2074 = vmul.f32 %v1946, 0.1
        %v2075 = vmul.f32 %v1947, 0.1
        %v2076 = vmul.f32 %v1948, 0.1
        %v2077 = vmax.f32 %v1821, %v1949
        %v2078 = vmax.f32 %v1822, %v1950
        %v2079 = vmax.f32 %v1823, %v1951
        %v2080 = vmax.f32 %v1824, %v1952
        %v2081 = vmax.f32 %v1825, %v1953
        %v2082 = vmax.f32 %v1826, %v1954
        %v2083 = vmax.f32 %v1827, %v1955
        %v2084 = vmax.f32 %v1828, %v1956
        %v2085 = vmax.f32 %v1829, %v1957
        %v2086 = vmax.f32 %v1830, %v1958
        %v2087 = vmax.f32 %v1831, %v1959
        %v2088 = vmax.f32 %v1832, %v1960
        %v2089 = vmax.f32 %v1833, %v1961
        %v2090 = vmax.f32 %v1834, %v1962
        %v2091 = vmax.f32 %v1835, %v1963
        %v2092 = vmax.f32 %v1836, %v1964
        %v2093 = vmax.f32 %v1837, %v1965
        %v2094 = vmax.f32 %v1838, %v1966
        %v2095 = vmax.f32 %v1839, %v1967
        %v2096 = vmax.f32 %v1840, %v1968
        %v2097 = vmax.f32 %v1841, %v1969
        %v2098 = vmax.f32 %v1842, %v1970
        %v2099 = vmax.f32 %v1843, %v1971
        %v2100 = vmax.f32 %v1844, %v1972
        %v2101 = vmax.f32 %v1845, %v1973
        %v2102 = vmax.f32 %v1846, %v1974
        %v2103 = vmax.f32 %v1847, %v1975
        %v2104 = vmax.f32 %v1848, %v1976
        %v2105 = vmax.f32 %v1849, %v1977
        %v2106 = vmax.f32 %v1850, %v1978
        %v2107 = vmax.f32 %v1851, %v1979
        %v2108 = vmax.f32 %v1852, %v1980
        %v2109 = vmax.f32 %v1853, %v1981
        %v2110 = vmax.f32 %v1854, %v1982
        %v2111 = vmax.f32 %v1855, %v1983
        %v2112 = vmax.f32 %v1856, %v1984
        %v2113 = vmax.f32 %v1857, %v1985
        %v2114 = vmax.f32 %v1858, %v1986
        %v2115 = vmax.f32 %v1859, %v1987
        %v2116 = vmax.f32 %v1860, %v1988
        %v2117 = vmax.f32 %v1861, %v1989
        %v2118 = vmax.f32 %v1862, %v1990
        %v2119 = vmax.f32 %v1863, %v1991
        %v2120 = vmax.f32 %v1864, %v1992
        %v2121 = vmax.f32 %v1865, %v1993
        %v2122 = vmax.f32 %v1866, %v1994
        %v2123 = vmax.f32 %v1867, %v1995
        %v2124 = vmax.f32 %v1868, %v1996
        %v2125 = vmax.f32 %v1869, %v1997
        %v2126 = vmax.f32 %v1870, %v1998
        %v2127 = vmax.f32 %v1871, %v1999
        %v2128 = vmax.f32 %v1872, %v2000
        %v2129 = vmax.f32 %v1873, %v2001
        %v2130 = vmax.f32 %v1874, %v2002
        %v2131 = vmax.f32 %v1875, %v2003
        %v2132 = vmax.f32 %v1876, %v2004
        %v2133 = vmax.f32 %v1877, %v2005
        %v2134 = vmax.f32 %v1878, %v2006
        %v2135 = vmax.f32 %v1879, %v2007
        %v2136 = vmax.f32 %v1880, %v2008
        %v2137 = vmax.f32 %v1881, %v2009
        %v2138 = vmax.f32 %v1882, %v2010
        %v2139 = vmax.f32 %v1883, %v2011
        %v2140 = vmax.f32 %v1884, %v2012
        %v2141 = vmax.f32 %v1885, %v2013
        %v2142 = vmax.f32 %v1886, %v2014
        %v2143 = vmax.f32 %v1887, %v2015
        %v2144 = vmax.f32 %v1888, %v2016
        %v2145 = vmax.f32 %v1889, %v2017
        %v2146 = vmax.f32 %v1890, %v2018
        %v2147 = vmax.f32 %v1891, %v2019
        %v2148 = vmax.f32 %v1892, %v2020
        %v2149 = vmax.f32 %v1893, %v2021
        %v2150 = vmax.f32 %v1894, %v2022
        %v2151 = vmax.f32 %v1895, %v2023
        %v2152 = vmax.f32 %v1896, %v2024
        %v2153 = vmax.f32 %v1897, %v2025
        %v2154 = vmax.f32 %v1898, %v2026
        %v2155 = vmax.f32 %v1899, %v2027
        %v2156 = vmax.f32 %v1900, %v2028
        %v2157 = vmax.f32 %v1901, %v2029
        %v2158 = vmax.f32 %v1902, %v2030
        %v2159 = vmax.f32 %v1903, %v2031
        %v2160 = vmax.f32 %v1904, %v2032
        %v2161 = vmax.f32 %v1905, %v2033
        %v2162 = vmax.f32 %v1906, %v2034
        %v2163 = vmax.f32 %v1907, %v2035
        %v2164 = vmax.f32 %v1908, %v2036
        %v2165 = vmax.f32 %v1909, %v2037
        %v2166 = vmax.f32 %v1910, %v2038
        %v2167 = vmax.f32 %v1911, %v2039
        %v2168 = vmax.f32 %v1912, %v2040
        %v2169 = vmax.f32 %v1913, %v2041
        %v2170 = vmax.f32 %v1914, %v2042
        %v2171 = vmax.f32 %v1915, %v2043
        %v2172 = vmax.f32 %v1916, %v2044
        %v2173 = vmax.f32 %v1917, %v2045
        %v2174 = vmax.f32 %v1918, %v2046
        %v2175 = vmax.f32 %v1919, %v2047
        %v2176 = vmax.f32 %v1920, %v2048
        %v2177 = vmax.f32 %v1921, %v2049
        %v2178 = vmax.f32 %v1922, %v2050
        %v2179 = vmax.f32 %v1923, %v2051
        %v2180 = vmax.f32 %v1924, %v2052
        %v2181 = vmax.f32 %v1925, %v2053
        %v2182 = vmax.f32 %v1926, %v2054
        %v2183 = vmax.f32 %v1927, %v2055
        %v2184 = vmax.f32 %v1928, %v2056
        %v2185 = vmax.f32 %v1929, %v2057
        %v2186 = vmax.f32 %v1930, %v2058
        %v2187 = vmax.f32 %v1931, %v2059
        %v2188 = vmax.f32 %v1932, %v2060
        %v2189 = vmax.f32 %v1933, %v2061
        %v2190 = vmax.f32 %v1934, %v2062
        %v2191 = vmax.f32 %v1935, %v2063
        %v2192 = vmax.f32 %v1936, %v2064
        %v2193 = vmax.f32 %v1937, %v2065
        %v2194 = vmax.f32 %v1938, %v2066
        %v2195 = vmax.f32 %v1939, %v2067
        %v2196 = vmax.f32 %v1940, %v2068
        %v2197 = vmax.f32 %v1941, %v2069
        %v2198 = vmax.f32 %v1942, %v2070
        %v2199 = vmax.f32 %v1943, %v2071
        %v2200 = vmax.f32 %v1944, %v2072
        %v2201 = vmax.f32 %v1945, %v2073
        %v2202 = vmax.f32 %v1946, %v2074
        %v2203 = vmax.f32 %v1947, %v2075
        %v2204 = vmax.f32 %v1948, %v2076
        %v2205 = vmax.f32 %v2077, %v2081
        %v2206 = vmax.f32 %v2078, %v2082
        %v2207 = vmax.f32 %v2079, %v2083
        %v2208 = vmax.f32 %v2080, %v2084
        %v2209 = vmax.f32 %v2085, %v2089
        %v2210 = vmax.f32 %v2086, %v2090
        %v2211 = vmax.f32 %v2087, %v2091
        %v2212 = vmax.f32 %v2088, %v2092
        %v2213 = vmax.f32 %v2093, %v2097
        %v2214 = vmax.f32 %v2094, %v2098
        %v2215 = vmax.f32 %v2095, %v2099
        %v2216 = vmax.f32 %v2096, %v2100
        %v2217 = vmax.f32 %v2101, %v2105
        %v2218 = vmax.f32 %v2102, %v2106
        %v2219 = vmax.f32 %v2103, %v2107
        %v2220 = vmax.f32 %v2104, %v2108
        %v2221 = vmax.f32 %v2109, %v2113
        %v2222 = vmax.f32 %v2110, %v2114
        %v2223 = vmax.f32 %v2111, %v2115
        %v2224 = vmax.f32 %v2112, %v2116
        %v2225 = vmax.f32 %v2117, %v2121
        %v2226 = vmax.f32 %v2118, %v2122
        %v2227 = vmax.f32 %v2119, %v2123
        %v2228 = vmax.f32 %v2120, %v2124
        %v2229 = vmax.f32 %v2125, %v2129
        %v2230 = vmax.f32 %v2126, %v2130
        %v2231 = vmax.f32 %v2127, %v2131
        %v2232 = vmax.f32 %v2128, %v2132
        %v2233 = vmax.f32 %v2133, %v2137
        %v2234 = vmax.f32 %v2134, %v2138
        %v2235 = vmax.f32 %v2135, %v2139
        %v2236 = vmax.f32 %v2136, %v2140
        %v2237 = vmax.f32 %v2141, %v2145
        %v2238 = vmax.f32 %v2142, %v2146
        %v2239 = vmax.f32 %v2143, %v2147
        %v2240 = vmax.f32 %v2144, %v2148
        %v2241 = vmax.f32 %v2149, %v2153
        %v2242 = vmax.f32 %v2150, %v2154
        %v2243 = vmax.f32 %v2151, %v2155
        %v2244 = vmax.f32 %v2152, %v2156
        %v2245 = vmax.f32 %v2157, %v2161
        %v2246 = vmax.f32 %v2158, %v2162
        %v2247 = vmax.f32 %v2159, %v2163
        %v2248 = vmax.f32 %v2160, %v2164
        %v2249 = vmax.f32 %v2165, %v2169
        %v2250 = vmax.f32 %v2166, %v2170
        %v2251 = vmax.f32 %v2167, %v2171
        %v2252 = vmax.f32 %v2168, %v2172
        %v2253 = vmax.f32 %v2173, %v2177
        %v2254 = vmax.f32 %v2174, %v2178
        %v2255 = vmax.f32 %v2175, %v2179
        %v2256 = vmax.f32 %v2176, %v2180
        %v2257 = vmax.f32 %v2181, %v2185
        %v2258 = vmax.f32 %v2182, %v2186
        %v2259 = vmax.f32 %v2183, %v2187
        %v2260 = vmax.f32 %v2184, %v2188
        %v2261 = vmax.f32 %v2189, %v2193
        %v2262 = vmax.f32 %v2190, %v2194
        %v2263 = vmax.f32 %v2191, %v2195
        %v2264 = vmax.f32 %v2192, %v2196
        %v2265 = vmax.f32 %v2197, %v2201
        %v2266 = vmax.f32 %v2198, %v2202
        %v2267 = vmax.f32 %v2199, %v2203
        %v2268 = vmax.f32 %v2200, %v2204
        %vm2269 = vcmask 523264
        %2270 = vst.msk [vmem:[#allocation2] sm:$0xff] %vm2269, %v2205
        %2271 = vst.msk [vmem:[#allocation2 + $0x8] sm:$0xff] %vm2269, %v2206
        %2272 = vst.msk [vmem:[#allocation2 + $0x10] sm:$0xff] %vm2269, %v2207
        %2273 = vst.msk [vmem:[#allocation2 + $0x18] sm:$0xff] %vm2269, %v2208
        %2274 = vst.msk [vmem:[#allocation2 + $0x20] sm:$0xff] %vm2269, %v2209
        %2275 = vst.msk [vmem:[#allocation2 + $0x28] sm:$0xff] %vm2269, %v2210
        %2276 = vst.msk [vmem:[#allocation2 + $0x30] sm:$0xff] %vm2269, %v2211
        %2277 = vst.msk [vmem:[#allocation2 + $0x38] sm:$0xff] %vm2269, %v2212
        %2278 = vst.msk [vmem:[#allocation2 + $0x40] sm:$0xff] %vm2269, %v2213
        %2279 = vst.msk [vmem:[#allocation2 + $0x48] sm:$0xff] %vm2269, %v2214
        %2280 = vst.msk [vmem:[#allocation2 + $0x50] sm:$0xff] %vm2269, %v2215
        %2281 = vst.msk [vmem:[#allocation2 + $0x58] sm:$0xff] %vm2269, %v2216
        %2282 = vst.msk [vmem:[#allocation2 + $0x60] sm:$0xff] %vm2269, %v2217
        %2283 = vst.msk [vmem:[#allocation2 + $0x68] sm:$0xff] %vm2269, %v2218
        %2284 = vst.msk [vmem:[#allocation2 + $0x70] sm:$0xff] %vm2269, %v2219
        %2285 = vst.msk [vmem:[#allocation2 + $0x78] sm:$0xff] %vm2269, %v2220
        %2286 = vst.msk [vmem:[#allocation2 + $0x80] sm:$0xff] %vm2269, %v2221
        %2287 = vst.msk [vmem:[#allocation2 + $0x88] sm:$0xff] %vm2269, %v2222
        %2288 = vst.msk [vmem:[#allocation2 + $0x90] sm:$0xff] %vm2269, %v2223
        %2289 = vst.msk [vmem:[#allocation2 + $0x98] sm:$0xff] %vm2269, %v2224
        %2290 = vst.msk [vmem:[#allocation2 + $0xa0] sm:$0xff] %vm2269, %v2225
        %2291 = vst.msk [vmem:[#allocation2 + $0xa8] sm:$0xff] %vm2269, %v2226
        %2292 = vst.msk [vmem:[#allocation2 + $0xb0] sm:$0xff] %vm2269, %v2227
        %2293 = vst.msk [vmem:[#allocation2 + $0xb8] sm:$0xff] %vm2269, %v2228
        %2294 = vst.msk [vmem:[#allocation2 + $0xc0] sm:$0xff] %vm2269, %v2229
        %2295 = vst.msk [vmem:[#allocation2 + $0xc8] sm:$0xff] %vm2269, %v2230
        %2296 = vst.msk [vmem:[#allocation2 + $0xd0] sm:$0xff] %vm2269, %v2231
        %2297 = vst.msk [vmem:[#allocation2 + $0xd8] sm:$0xff] %vm2269, %v2232
        %2298 = vst.msk [vmem:[#allocation2 + $0xe0] sm:$0xff] %vm2269, %v2233
        %2299 = vst.msk [vmem:[#allocation2 + $0xe8] sm:$0xff] %vm2269, %v2234
        %2300 = vst.msk [vmem:[#allocation2 + $0xf0] sm:$0xff] %vm2269, %v2235
        %2301 = vst.msk [vmem:[#allocation2 + $0xf8] sm:$0xff] %vm2269, %v2236
        %2302 = vst.msk [vmem:[#allocation2 + $0x100] sm:$0xff] %vm2269, %v2237
        %2303 = vst.msk [vmem:[#allocation2 + $0x108] sm:$0xff] %vm2269, %v2238
        %2304 = vst.msk [vmem:[#allocation2 + $0x110] sm:$0xff] %vm2269, %v2239
        %2305 = vst.msk [vmem:[#allocation2 + $0x118] sm:$0xff] %vm2269, %v2240
        %2306 = vst.msk [vmem:[#allocation2 + $0x120] sm:$0xff] %vm2269, %v2241
        %2307 = vst.msk [vmem:[#allocation2 + $0x128] sm:$0xff] %vm2269, %v2242
        %2308 = vst.msk [vmem:[#allocation2 + $0x130] sm:$0xff] %vm2269, %v2243
        %2309 = vst.msk [vmem:[#allocation2 + $0x138] sm:$0xff] %vm2269, %v2244
        %2310 = vst.msk [vmem:[#allocation2 + $0x140] sm:$0xff] %vm2269, %v2245
        %2311 = vst.msk [vmem:[#allocation2 + $0x148] sm:$0xff] %vm2269, %v2246
        %2312 = vst.msk [vmem:[#allocation2 + $0x150] sm:$0xff] %vm2269, %v2247
        %2313 = vst.msk [vmem:[#allocation2 + $0x158] sm:$0xff] %vm2269, %v2248
        %2314 = vst.msk [vmem:[#allocation2 + $0x160] sm:$0xff] %vm2269, %v2249
        %2315 = vst.msk [vmem:[#allocation2 + $0x168] sm:$0xff] %vm2269, %v2250
        %2316 = vst.msk [vmem:[#allocation2 + $0x170] sm:$0xff] %vm2269, %v2251
        %2317 = vst.msk [vmem:[#allocation2 + $0x178] sm:$0xff] %vm2269, %v2252
        %2318 = vst.msk [vmem:[#allocation2 + $0x180] sm:$0xff] %vm2269, %v2253
        %2319 = vst.msk [vmem:[#allocation2 + $0x188] sm:$0xff] %vm2269, %v2254
        %2320 = vst.msk [vmem:[#allocation2 + $0x190] sm:$0xff] %vm2269, %v2255
        %2321 = vst.msk [vmem:[#allocation2 + $0x198] sm:$0xff] %vm2269, %v2256
        %2322 = vst.msk [vmem:[#allocation2 + $0x1a0] sm:$0xff] %vm2269, %v2257
        %2323 = vst.msk [vmem:[#allocation2 + $0x1a8] sm:$0xff] %vm2269, %v2258
        %2324 = vst.msk [vmem:[#allocation2 + $0x1b0] sm:$0xff] %vm2269, %v2259
        %2325 = vst.msk [vmem:[#allocation2 + $0x1b8] sm:$0xff] %vm2269, %v2260
        %2326 = vst.msk [vmem:[#allocation2 + $0x1c0] sm:$0xff] %vm2269, %v2261
        %2327 = vst.msk [vmem:[#allocation2 + $0x1c8] sm:$0xff] %vm2269, %v2262
        %2328 = vst.msk [vmem:[#allocation2 + $0x1d0] sm:$0xff] %vm2269, %v2263
        %2329 = vst.msk [vmem:[#allocation2 + $0x1d8] sm:$0xff] %vm2269, %v2264
        %2330 = vst.msk [vmem:[#allocation2 + $0x1e0] sm:$0xff] %vm2269, %v2265
        %2331 = vst.msk [vmem:[#allocation2 + $0x1e8] sm:$0xff] %vm2269, %v2266
        %2332 = vst.msk [vmem:[#allocation2 + $0x1f0] sm:$0xff] %vm2269, %v2267
        %2333 = vst.msk [vmem:[#allocation2 + $0x1f8] sm:$0xff] %vm2269, %v2268
        %v2334 = vld [vmem:[#allocation2] ss:$2 sm:$0xff]
        %s2335 = scalar_lea.vmem [#allocation2], 16
        %v2336 = vld [vmem:[%s2335] ss:$2 sm:$0xff]
        %s2337 = scalar_lea.vmem [#allocation2], 32
        %v2338 = vld [vmem:[%s2337] ss:$2 sm:$0xff]
        %s2339 = scalar_lea.vmem [#allocation2], 48
        %v2340 = vld [vmem:[%s2339] ss:$2 sm:$0xff]
        %s2341 = scalar_lea.vmem [#allocation2], 64
        %v2342 = vld [vmem:[%s2341] ss:$2 sm:$0xff]
        %s2343 = scalar_lea.vmem [#allocation2], 80
        %v2344 = vld [vmem:[%s2343] ss:$2 sm:$0xff]
        %s2345 = scalar_lea.vmem [#allocation2], 96
        %v2346 = vld [vmem:[%s2345] ss:$2 sm:$0xff]
        %s2347 = scalar_lea.vmem [#allocation2], 112
        %v2348 = vld [vmem:[%s2347] ss:$2 sm:$0xff]
        %s2349 = scalar_lea.vmem [#allocation2], 128
        %v2350 = vld [vmem:[%s2349] ss:$2 sm:$0xff]
        %s2351 = scalar_lea.vmem [#allocation2], 144
        %v2352 = vld [vmem:[%s2351] ss:$2 sm:$0xff]
        %s2353 = scalar_lea.vmem [#allocation2], 160
        %v2354 = vld [vmem:[%s2353] ss:$2 sm:$0xff]
        %s2355 = scalar_lea.vmem [#allocation2], 176
        %v2356 = vld [vmem:[%s2355] ss:$2 sm:$0xff]
        %s2357 = scalar_lea.vmem [#allocation2], 192
        %v2358 = vld [vmem:[%s2357] ss:$2 sm:$0xff]
        %s2359 = scalar_lea.vmem [#allocation2], 208
        %v2360 = vld [vmem:[%s2359] ss:$2 sm:$0xff]
        %s2361 = scalar_lea.vmem [#allocation2], 224
        %v2362 = vld [vmem:[%s2361] ss:$2 sm:$0xff]
        %s2363 = scalar_lea.vmem [#allocation2], 240
        %v2364 = vld [vmem:[%s2363] ss:$2 sm:$0xff]
        %s2365 = scalar_lea.vmem [#allocation2], 256
        %v2366 = vld [vmem:[%s2365] ss:$2 sm:$0xff]
        %s2367 = scalar_lea.vmem [#allocation2], 272
        %v2368 = vld [vmem:[%s2367] ss:$2 sm:$0xff]
        %s2369 = scalar_lea.vmem [#allocation2], 288
        %v2370 = vld [vmem:[%s2369] ss:$2 sm:$0xff]
        %s2371 = scalar_lea.vmem [#allocation2], 304
        %v2372 = vld [vmem:[%s2371] ss:$2 sm:$0xff]
        %s2373 = scalar_lea.vmem [#allocation2], 320
        %v2374 = vld [vmem:[%s2373] ss:$2 sm:$0xff]
        %s2375 = scalar_lea.vmem [#allocation2], 336
        %v2376 = vld [vmem:[%s2375] ss:$2 sm:$0xff]
        %s2377 = scalar_lea.vmem [#allocation2], 352
        %v2378 = vld [vmem:[%s2377] ss:$2 sm:$0xff]
        %s2379 = scalar_lea.vmem [#allocation2], 368
        %v2380 = vld [vmem:[%s2379] ss:$2 sm:$0xff]
        %s2381 = scalar_lea.vmem [#allocation2], 384
        %v2382 = vld [vmem:[%s2381] ss:$2 sm:$0xff]
        %s2383 = scalar_lea.vmem [#allocation2], 400
        %v2384 = vld [vmem:[%s2383] ss:$2 sm:$0xff]
        %s2385 = scalar_lea.vmem [#allocation2], 416
        %v2386 = vld [vmem:[%s2385] ss:$2 sm:$0xff]
        %s2387 = scalar_lea.vmem [#allocation2], 432
        %v2388 = vld [vmem:[%s2387] ss:$2 sm:$0xff]
        %s2389 = scalar_lea.vmem [#allocation2], 448
        %v2390 = vld [vmem:[%s2389] ss:$2 sm:$0xff]
        %s2391 = scalar_lea.vmem [#allocation2], 464
        %v2392 = vld [vmem:[%s2391] ss:$2 sm:$0xff]
        %s2393 = scalar_lea.vmem [#allocation2], 480
        %v2394 = vld [vmem:[%s2393] ss:$2 sm:$0xff]
        %s2395 = scalar_lea.vmem [#allocation2], 496
        %v2396 = vld [vmem:[%s2395] ss:$2 sm:$0xff]
        %s2397 = scalar_lea.vmem [#allocation2], 1
        %v2398 = vld [vmem:[%s2397] ss:$2 sm:$0xff]
        %s2399 = scalar_lea.vmem [#allocation2], 17
        %v2400 = vld [vmem:[%s2399] ss:$2 sm:$0xff]
        %s2401 = scalar_lea.vmem [#allocation2], 33
        %v2402 = vld [vmem:[%s2401] ss:$2 sm:$0xff]
        %s2403 = scalar_lea.vmem [#allocation2], 49
        %v2404 = vld [vmem:[%s2403] ss:$2 sm:$0xff]
        %s2405 = scalar_lea.vmem [#allocation2], 65
        %v2406 = vld [vmem:[%s2405] ss:$2 sm:$0xff]
        %s2407 = scalar_lea.vmem [#allocation2], 81
        %v2408 = vld [vmem:[%s2407] ss:$2 sm:$0xff]
        %s2409 = scalar_lea.vmem [#allocation2], 97
        %v2410 = vld [vmem:[%s2409] ss:$2 sm:$0xff]
        %s2411 = scalar_lea.vmem [#allocation2], 113
        %v2412 = vld [vmem:[%s2411] ss:$2 sm:$0xff]
        %s2413 = scalar_lea.vmem [#allocation2], 129
        %v2414 = vld [vmem:[%s2413] ss:$2 sm:$0xff]
        %s2415 = scalar_lea.vmem [#allocation2], 145
        %v2416 = vld [vmem:[%s2415] ss:$2 sm:$0xff]
        %s2417 = scalar_lea.vmem [#allocation2], 161
        %v2418 = vld [vmem:[%s2417] ss:$2 sm:$0xff]
        %s2419 = scalar_lea.vmem [#allocation2], 177
        %v2420 = vld [vmem:[%s2419] ss:$2 sm:$0xff]
        %s2421 = scalar_lea.vmem [#allocation2], 193
        %v2422 = vld [vmem:[%s2421] ss:$2 sm:$0xff]
        %s2423 = scalar_lea.vmem [#allocation2], 209
        %v2424 = vld [vmem:[%s2423] ss:$2 sm:$0xff]
        %s2425 = scalar_lea.vmem [#allocation2], 225
        %v2426 = vld [vmem:[%s2425] ss:$2 sm:$0xff]
        %s2427 = scalar_lea.vmem [#allocation2], 241
        %v2428 = vld [vmem:[%s2427] ss:$2 sm:$0xff]
        %s2429 = scalar_lea.vmem [#allocation2], 257
        %v2430 = vld [vmem:[%s2429] ss:$2 sm:$0xff]
        %s2431 = scalar_lea.vmem [#allocation2], 273
        %v2432 = vld [vmem:[%s2431] ss:$2 sm:$0xff]
        %s2433 = scalar_lea.vmem [#allocation2], 289
        %v2434 = vld [vmem:[%s2433] ss:$2 sm:$0xff]
        %s2435 = scalar_lea.vmem [#allocation2], 305
        %v2436 = vld [vmem:[%s2435] ss:$2 sm:$0xff]
        %s2437 = scalar_lea.vmem [#allocation2], 321
        %v2438 = vld [vmem:[%s2437] ss:$2 sm:$0xff]
        %s2439 = scalar_lea.vmem [#allocation2], 337
        %v2440 = vld [vmem:[%s2439] ss:$2 sm:$0xff]
        %s2441 = scalar_lea.vmem [#allocation2], 353
        %v2442 = vld [vmem:[%s2441] ss:$2 sm:$0xff]
        %s2443 = scalar_lea.vmem [#allocation2], 369
        %v2444 = vld [vmem:[%s2443] ss:$2 sm:$0xff]
        %s2445 = scalar_lea.vmem [#allocation2], 385
        %v2446 = vld [vmem:[%s2445] ss:$2 sm:$0xff]
        %s2447 = scalar_lea.vmem [#allocation2], 401
        %v2448 = vld [vmem:[%s2447] ss:$2 sm:$0xff]
        %s2449 = scalar_lea.vmem [#allocation2], 417
        %v2450 = vld [vmem:[%s2449] ss:$2 sm:$0xff]
        %s2451 = scalar_lea.vmem [#allocation2], 433
        %v2452 = vld [vmem:[%s2451] ss:$2 sm:$0xff]
        %s2453 = scalar_lea.vmem [#allocation2], 449
        %v2454 = vld [vmem:[%s2453] ss:$2 sm:$0xff]
        %s2455 = scalar_lea.vmem [#allocation2], 465
        %v2456 = vld [vmem:[%s2455] ss:$2 sm:$0xff]
        %s2457 = scalar_lea.vmem [#allocation2], 481
        %v2458 = vld [vmem:[%s2457] ss:$2 sm:$0xff]
        %s2459 = scalar_lea.vmem [#allocation2], 497
        %v2460 = vld [vmem:[%s2459] ss:$2 sm:$0xff]
        %v2461 = vmax.f32 %v2334, %v2398
        %v2462 = vmax.f32 %v2336, %v2400
        %v2463 = vmax.f32 %v2338, %v2402
        %v2464 = vmax.f32 %v2340, %v2404
        %v2465 = vmax.f32 %v2342, %v2406
        %v2466 = vmax.f32 %v2344, %v2408
        %v2467 = vmax.f32 %v2346, %v2410
        %v2468 = vmax.f32 %v2348, %v2412
        %v2469 = vmax.f32 %v2350, %v2414
        %v2470 = vmax.f32 %v2352, %v2416
        %v2471 = vmax.f32 %v2354, %v2418
        %v2472 = vmax.f32 %v2356, %v2420
        %v2473 = vmax.f32 %v2358, %v2422
        %v2474 = vmax.f32 %v2360, %v2424
        %v2475 = vmax.f32 %v2362, %v2426
        %v2476 = vmax.f32 %v2364, %v2428
        %v2477 = vmax.f32 %v2366, %v2430
        %v2478 = vmax.f32 %v2368, %v2432
        %v2479 = vmax.f32 %v2370, %v2434
        %v2480 = vmax.f32 %v2372, %v2436
        %v2481 = vmax.f32 %v2374, %v2438
        %v2482 = vmax.f32 %v2376, %v2440
        %v2483 = vmax.f32 %v2378, %v2442
        %v2484 = vmax.f32 %v2380, %v2444
        %v2485 = vmax.f32 %v2382, %v2446
        %v2486 = vmax.f32 %v2384, %v2448
        %v2487 = vmax.f32 %v2386, %v2450
        %v2488 = vmax.f32 %v2388, %v2452
        %v2489 = vmax.f32 %v2390, %v2454
        %v2490 = vmax.f32 %v2392, %v2456
        %v2491 = vmax.f32 %v2394, %v2458
        %v2492 = vmax.f32 %v2396, %v2460
        %v2493 = vpack.c.bf16 %v2462, %v2461
        %v2494 = vpack.c.bf16 %v2464, %v2463
        %v2495 = vpack.c.bf16 %v2466, %v2465
        %v2496 = vpack.c.bf16 %v2468, %v2467
        %v2497 = vpack.c.bf16 %v2470, %v2469
        %v2498 = vpack.c.bf16 %v2472, %v2471
        %v2499 = vpack.c.bf16 %v2474, %v2473
        %v2500 = vpack.c.bf16 %v2476, %v2475
        %v2501 = vpack.c.bf16 %v2478, %v2477
        %v2502 = vpack.c.bf16 %v2480, %v2479
        %v2503 = vpack.c.bf16 %v2482, %v2481
        %v2504 = vpack.c.bf16 %v2484, %v2483
        %v2505 = vpack.c.bf16 %v2486, %v2485
        %v2506 = vpack.c.bf16 %v2488, %v2487
        %v2507 = vpack.c.bf16 %v2490, %v2489
        %v2508 = vpack.c.bf16 %v2492, %v2491
        %v2525 = vunpack.c.l.b16 %v2493
        %v2526 = vunpack.c.h.b16 %v2493
        %v2527 = vunpack.c.l.b16 %v2494
        %v2528 = vunpack.c.h.b16 %v2494
        %v2529 = vunpack.c.l.b16 %v2495
        %v2530 = vunpack.c.h.b16 %v2495
        %v2531 = vunpack.c.l.b16 %v2496
        %v2532 = vunpack.c.h.b16 %v2496
        %v2533 = vunpack.c.l.b16 %v2497
        %v2534 = vunpack.c.h.b16 %v2497
        %v2535 = vunpack.c.l.b16 %v2498
        %v2536 = vunpack.c.h.b16 %v2498
        %v2537 = vunpack.c.l.b16 %v2499
        %v2538 = vunpack.c.h.b16 %v2499
        %v2539 = vunpack.c.l.b16 %v2500
        %v2540 = vunpack.c.h.b16 %v2500
        %v2541 = vunpack.c.l.b16 %v2501
        %v2542 = vunpack.c.h.b16 %v2501
        %v2543 = vunpack.c.l.b16 %v2502
        %v2544 = vunpack.c.h.b16 %v2502
        %v2545 = vunpack.c.l.b16 %v2503
        %v2546 = vunpack.c.h.b16 %v2503
        %v2547 = vunpack.c.l.b16 %v2504
        %v2548 = vunpack.c.h.b16 %v2504
        %v2549 = vunpack.c.l.b16 %v2505
        %v2550 = vunpack.c.h.b16 %v2505
        %v2551 = vunpack.c.l.b16 %v2506
        %v2552 = vunpack.c.h.b16 %v2506
        %v2553 = vunpack.c.l.b16 %v2507
        %v2554 = vunpack.c.h.b16 %v2507
        %v2555 = vunpack.c.l.b16 %v2508
        %v2556 = vunpack.c.h.b16 %v2508
        %v2557 = vpack.c.b16 %v2525, %v2525
        %v2558 = vpack.c.b16 %v2526, %v2526
        %v2559 = vpack.c.b16 %v2527, %v2527
        %v2560 = vpack.c.b16 %v2528, %v2528
        %v2561 = vpack.c.b16 %v2529, %v2529
        %v2562 = vpack.c.b16 %v2530, %v2530
        %v2563 = vpack.c.b16 %v2531, %v2531
        %v2564 = vpack.c.b16 %v2532, %v2532
        %v2565 = vpack.c.b16 %v2533, %v2533
        %v2566 = vpack.c.b16 %v2534, %v2534
        %v2567 = vpack.c.b16 %v2535, %v2535
        %v2568 = vpack.c.b16 %v2536, %v2536
        %v2569 = vpack.c.b16 %v2537, %v2537
        %v2570 = vpack.c.b16 %v2538, %v2538
        %v2571 = vpack.c.b16 %v2539, %v2539
        %v2572 = vpack.c.b16 %v2540, %v2540
        %v2573 = vpack.c.b16 %v2541, %v2541
        %v2574 = vpack.c.b16 %v2542, %v2542
        %v2575 = vpack.c.b16 %v2543, %v2543
        %v2576 = vpack.c.b16 %v2544, %v2544
        %v2577 = vpack.c.b16 %v2545, %v2545
        %v2578 = vpack.c.b16 %v2546, %v2546
        %v2579 = vpack.c.b16 %v2547, %v2547
        %v2580 = vpack.c.b16 %v2548, %v2548
        %v2581 = vpack.c.b16 %v2549, %v2549
        %v2582 = vpack.c.b16 %v2550, %v2550
        %v2583 = vpack.c.b16 %v2551, %v2551
        %v2584 = vpack.c.b16 %v2552, %v2552
        %v2585 = vpack.c.b16 %v2553, %v2553
        %v2586 = vpack.c.b16 %v2554, %v2554
        %v2587 = vpack.c.b16 %v2555, %v2555
        %v2588 = vpack.c.b16 %v2556, %v2556
        %vm2621 = vcmask 519168
        %2622 = vst.msk [vmem:[%s234] sm:$0xf] %vm2621, %v2557
        %2623 = vst.msk [vmem:[%s234 + $0x4] sm:$0xf] %vm2621, %v2558
        %2624 = vst.msk [vmem:[%s234 + $0x8] sm:$0xf] %vm2621, %v2559
        %2625 = vst.msk [vmem:[%s234 + $0xc] sm:$0xf] %vm2621, %v2560
        %2626 = vst.msk [vmem:[%s234 + $0x10] sm:$0xf] %vm2621, %v2561
        %2627 = vst.msk [vmem:[%s234 + $0x14] sm:$0xf] %vm2621, %v2562
        %2628 = vst.msk [vmem:[%s234 + $0x18] sm:$0xf] %vm2621, %v2563
        %2629 = vst.msk [vmem:[%s234 + $0x1c] sm:$0xf] %vm2621, %v2564
        %2630 = vst.msk [vmem:[%s234 + $0x20] sm:$0xf] %vm2621, %v2565
        %2631 = vst.msk [vmem:[%s234 + $0x24] sm:$0xf] %vm2621, %v2566
        %2632 = vst.msk [vmem:[%s234 + $0x28] sm:$0xf] %vm2621, %v2567
        %2633 = vst.msk [vmem:[%s234 + $0x2c] sm:$0xf] %vm2621, %v2568
        %2634 = vst.msk [vmem:[%s234 + $0x30] sm:$0xf] %vm2621, %v2569
        %2635 = vst.msk [vmem:[%s234 + $0x34] sm:$0xf] %vm2621, %v2570
        %2636 = vst.msk [vmem:[%s234 + $0x38] sm:$0xf] %vm2621, %v2571
        %2637 = vst.msk [vmem:[%s234 + $0x3c] sm:$0xf] %vm2621, %v2572
        %2638 = vst.msk [vmem:[%s234 + $0x40] sm:$0xf] %vm2621, %v2573
        %2639 = vst.msk [vmem:[%s234 + $0x44] sm:$0xf] %vm2621, %v2574
        %2640 = vst.msk [vmem:[%s234 + $0x48] sm:$0xf] %vm2621, %v2575
        %2641 = vst.msk [vmem:[%s234 + $0x4c] sm:$0xf] %vm2621, %v2576
        %2642 = vst.msk [vmem:[%s234 + $0x50] sm:$0xf] %vm2621, %v2577
        %2643 = vst.msk [vmem:[%s234 + $0x54] sm:$0xf] %vm2621, %v2578
        %2644 = vst.msk [vmem:[%s234 + $0x58] sm:$0xf] %vm2621, %v2579
        %2645 = vst.msk [vmem:[%s234 + $0x5c] sm:$0xf] %vm2621, %v2580
        %2646 = vst.msk [vmem:[%s234 + $0x60] sm:$0xf] %vm2621, %v2581
        %2647 = vst.msk [vmem:[%s234 + $0x64] sm:$0xf] %vm2621, %v2582
        %2648 = vst.msk [vmem:[%s234 + $0x68] sm:$0xf] %vm2621, %v2583
        %2649 = vst.msk [vmem:[%s234 + $0x6c] sm:$0xf] %vm2621, %v2584
        %2650 = vst.msk [vmem:[%s234 + $0x70] sm:$0xf] %vm2621, %v2585
        %2651 = vst.msk [vmem:[%s234 + $0x74] sm:$0xf] %vm2621, %v2586
        %2652 = vst.msk [vmem:[%s234 + $0x78] sm:$0xf] %vm2621, %v2587
        %2653 = vst.msk [vmem:[%s234 + $0x7c] sm:$0xf] %vm2621, %v2588
        %s2654 = sand.u32 %s134, 1
        %s2655 = scalar_lea.sflag [#allocation5], %s2654
        %s2656 = sand.u32 %s134, 1
        %s2657 = smul.addr %s2656, 128
        %s2658 = scalar_lea.vmem [#allocation6], %s2657
        // Predicated region
        $region41: #{tpu_custom_call.1} parent=35 // pred_check
          %p2659 = pneg %p144
        $region42: #{tpu_custom_call.1} parent=35 // pred_check_branch
          %2661 = sbr.rel (%p2659) target = $region44
        $region43: #{tpu_custom_call.1} parent=35 // pred_region
          %s2662 = smul.u32 16, %s26
          %s2664 = ssub.s32 2048, 2048
          %2665 = vsyncadd %s2655, %s2664
          %s2666 = smul.addr %s2662, 2
          %s2667 = smul.addr %s25, 32
          %s2668 = sadd.s32 %s2666, %s2667
          %s2669 = smul.addr %s2668, 64
          %s2670 = scalar_lea.hbm %s4, %s2669
          %s2671 = sshll.u32 %s2658, 4
          %s2672 = int_to_ptr.vmem [resolvable:$true] %s2671
          %2677 = dma.vmem_to_hbm [thread:$0]  %s2672, 2048, %s2670, %s2655, 64, 64, 4
        $region44: #{tpu_custom_call.1} parent=35 // pred_fallthru
          _
      $region36: #{tpu_custom_call.1} parent=5 // pred_fallthru
        _
      %p2678 = scmp.le.s32.totalorder 2, %s16
      // Predicated region
      $region45: #{tpu_custom_call.1} parent=5 // pred_check
        %p2679 = pneg %p2678
      $region46: #{tpu_custom_call.1} parent=5 // pred_check_branch
        %2681 = sbr.rel (%p2679) target = $region48
      $region47: #{tpu_custom_call.1} parent=5 // pred_region
        %s2682 = ssub.s32 %s16, 2
        // Predicated region
        $region49: #{tpu_custom_call.1} parent=47 // pred_check
          %p2683 = pneg %p150
        $region50: #{tpu_custom_call.1} parent=47 // pred_check_branch
          %2685 = sbr.rel (%p2683) target = $region52
        $region51: #{tpu_custom_call.1} parent=47 // pred_region
          %s2686 = sand.u32 %s135, 1
          %s2687 = scalar_lea.sflag [#allocation5], %s2686
          %s2688 = sand.u32 %s135, 1
          %s2689 = smul.addr %s2688, 128
          %s2690 = scalar_lea.vmem [#allocation6], %s2689
          %2691 = dma.done %s2687, 2048
        $region52: #{tpu_custom_call.1} parent=47 // pred_fallthru
          _
      $region48: #{tpu_custom_call.1} parent=5 // pred_fallthru
        _
    $region6: #{tpu_custom_call.1} parent=1 // loop_footer
      %s20 = sadd.s32 1, %s16
    $region7: #{tpu_custom_call.1} parent=1 // loop_footer_branch
      %15 = sbr.rel target = $region3
    $region8: #{tpu_custom_call.1} parent=1 // loop_exit
      _
    %2692 = vsyncpa [#allocation4], 1
    %s2693 = scalar_lea.sflag [#allocation4], 1
    %2694 = vsyncpa %s2693, 1
    %2695 = vsyncpa [#allocation5], 1
    %s2696 = scalar_lea.sflag [#allocation5], 1
    %2697 = vsyncpa %s2696, 1

</llo_original>
